<compile_context>
chip_gen: v7x
topology: tpu7x:2x2x1
jax: 0.10.0
libtpu: 0.0.40
codegen_flags: <defaults>
</compile_context>

<pallas_src>
import jax
import jax.numpy as jnp
from jax.experimental import pallas as pl
from jax.experimental.pallas import tpu as pltpu

EPS = 1e-5


def _round_up(x, m):
    return ((x + m - 1) // m) * m


# ----------------------------- Pallas kernel ------------------------------ #
def _aux_head_kernel(x_ref, wpc_ref, b1_ref, w2_ref, b2_ref, wl_ref, bl_ref,
                     o_ref):
    # x: (TN, C*H*W) bf16 tile of the flattened NCHW input.
    x = jnp.maximum(x_ref[...], 0)                              # ReLU (bf16)

    # AvgPool(5) + 1x1 conv + BN1 scale fused into W_pc (C*H*W, 4*128):
    # one MXU matmul -> (TN, 512); then folded BN1 bias + ReLU.
    h1 = jnp.dot(x, wpc_ref[...], preferred_element_type=jnp.float32)
    h1 = jnp.maximum(h1 + b1_ref[...], 0.0)

    # 2x2 conv on a 2x2 map == (TN, 512) @ (512, 768) (BN2 scale folded in);
    # then folded BN2 bias + ReLU.
    w2 = w2_ref[...]
    h2 = jnp.dot(h1.astype(w2.dtype), w2, preferred_element_type=jnp.float32)
    h2 = jnp.maximum(h2 + b2_ref[...], 0.0)

    # Linear head, lane-dense (padded to a multiple of 128 output columns).
    wl = wl_ref[...]
    o_ref[...] = (jnp.dot(h2.astype(wl.dtype), wl,
                          preferred_element_type=jnp.float32) + bl_ref[...])


# --------------------------- parameter folding ----------------------------- #
def fold_bn(gamma, beta, mean, var):
    scale = gamma / jnp.sqrt(var + EPS)
    bias = beta - mean * scale
    return scale, bias


def prepare_params(w1_pt, bn1, w2_pt, bn2, wl_pt, bl_pt, *, input_size, C,
                   weight_dtype=jnp.bfloat16):
    """Repackage PyTorch-layout parameters into fused/folded kernel form."""
    assert input_size in (7, 8)
    stride = input_size - 5
    H = W = input_size

    # Pooling matrix P: (H*W, 4) with 1/25 where spatial (h, w) falls inside
    # pooling window pos = i*2 + j (matches the 2x2 conv's (kh, kw) order).
    rows = []
    for h in range(H):
        for w in range(W):
            row = []
            for i in range(2):
                for j in range(2):
                    inside = (i * stride <= h < i * stride + 5 and
                              j * stride <= w < j * stride + 5)
                    row.append(1.0 / 25.0 if inside else 0.0)
            rows.append(row)
    P = jnp.array(rows, jnp.float32)                           # (H*W, 4)

    # 1x1 conv as a (C, 128) matmul; fold the pooling into it:
    #   W_pc[c*H*W + s, pos*128 + oc] = P[s, pos] * w1[c, oc]
    w1 = jnp.transpose(w1_pt[:, :, 0, 0], (1, 0))              # (C, 128)
    wpc = jnp.einsum('sp,co->cspo', P, w1).reshape(C * H * W, 4 * 128)

    # BN1: fold the scale into the W_pc columns (f32, pre-bf16-cast); keep bias.
    s1, b1 = fold_bn(*bn1)                                     # (128,)
    s1_t = jnp.tile(s1, 4)                                     # (pos, oc) order
    wpc = wpc * s1_t[None, :]
    b1 = jnp.tile(b1, 4).reshape(1, 512)

    # 2x2 conv on the 2x2 map: flatten (kh, kw, ic) -> (512, 768) matmul;
    # fold the BN2 scale into the columns, keep the bias.
    w2 = jnp.transpose(w2_pt, (2, 3, 1, 0)).reshape(2 * 2 * 128, 768)
    s2, b2 = fold_bn(*bn2)
    w2 = w2 * s2[None, :]
    b2 = b2.reshape(1, 768)

    # Linear head, zero-padded to a lane-dense 128-multiple output width.
    # (Keep cls_pad at the minimum 128 multiple; no need to fill the MXU.)
    n_classes = wl_pt.shape[0]
    cls_pad = _round_up(n_classes, 128)
    wl = jnp.zeros((768, cls_pad), jnp.float32).at[:, :n_classes].set(
        jnp.transpose(wl_pt, (1, 0)))
    bl = jnp.zeros((1, cls_pad), jnp.float32).at[0, :n_classes].set(bl_pt)

    wd = weight_dtype
    return dict(
        wpc=wpc.astype(wd), b1=b1,
        w2=w2.astype(wd), b2=b2,
        wl=wl.astype(wd), bl=bl,
        n_classes=n_classes, cls_pad=cls_pad,
        input_size=input_size, C=C)


# ------------------------------- wrapper ----------------------------------- #
def aux_head_pallas(x_nchw, params, *, block_n=512):
    N, C, H, W = x_nchw.shape
    assert C == params['C'] and H == W == params['input_size']
    F = C * H * W
    cls_pad = params['cls_pad']

    # Stream activations as bf16 (ReLU is done in-kernel; cast commutes with
    # ReLU).  Reshape is a free view; no batch padding / HBM copy.
    x_flat = x_nchw.reshape(N, F).astype(jnp.bfloat16)

    # Batch tile: multiple of 8 sublanes, at most block_n rows, and capped at
    # ceil(N/2) so the "parallel" grid has >=2 steps whenever N > 8 (lets v7x
    # use both TensorCores).  Partial last block handled by Pallas.
    TN = min(_round_up(block_n, 8), _round_up(pl.cdiv(N, 2), 8))
    grid = (pl.cdiv(N, TN),)

    const = lambda i: (0, 0)
    weight_keys = ('wpc', 'b1', 'w2', 'b2', 'wl', 'bl')
    in_specs = [pl.BlockSpec((TN, F), lambda i: (i, 0))] + [
        pl.BlockSpec(params[k].shape, const) for k in weight_keys
    ]
    out_specs = pl.BlockSpec((TN, cls_pad), lambda i: (i, 0))

    # Explicit VMEM budget from actual tile sizes (double-buffered operands +
    # f32 intermediates), with generous headroom; capped under v7x's 64 MiB.
    weight_bytes = sum(int(params[k].size) * params[k].dtype.itemsize
                       for k in weight_keys)
    est = (2 * (TN * F * 2)                 # bf16 x tile, double-buffered
           + 2 * (TN * cls_pad * 4)         # f32 out tile, double-buffered
           + 2 * weight_bytes               # resident weights (2x allocation)
           + 2 * TN * (512 + 768) * 4)      # f32 intermediates h1/h2
    vmem_limit = int(min(max(2 * est, 16 << 20), 64 << 20))

    out = pl.pallas_call(
        _aux_head_kernel,
        out_shape=jax.ShapeDtypeStruct((N, cls_pad), jnp.float32),
        grid=grid,
        in_specs=in_specs,
        out_specs=out_specs,
        compiler_params=pltpu.CompilerParams(
            dimension_semantics=("parallel",),
            vmem_limit_bytes=vmem_limit),
    )(x_flat, *(params[k] for k in weight_keys))

    return out[:, :params['n_classes']]


# ------------------------- pure-JAX references ------------------------------ #
def aux_head_reference(x_nchw, w1_pt, bn1, w2_pt, bn2, wl_pt, bl_pt, *, input_size):
    """Full-precision f32 reference matching the PyTorch module."""
    stride = input_size - 5
    h = jnp.maximum(x_nchw, 0.0)
    h = jax.lax.reduce_window(h, 0.0, jax.lax.add,
                              (1, 1, 5, 5), (1, 1, stride, stride),
                              'VALID') / 25.0
    h = jax.lax.conv_general_dilated(h, w1_pt, (1, 1), 'VALID',
                                     dimension_numbers=('NCHW', 'OIHW', 'NCHW'))
    g, b, m, v = bn1
    h = (h - m[None, :, None, None]) / jnp.sqrt(v[None, :, None, None] + EPS) \
        * g[None, :, None, None] + b[None, :, None, None]
    h = jnp.maximum(h, 0.0)
    h = jax.lax.conv_general_dilated(h, w2_pt, (1, 1), 'VALID',
                                     dimension_numbers=('NCHW', 'OIHW', 'NCHW'))
    g, b, m, v = bn2
    h = (h - m[None, :, None, None]) / jnp.sqrt(v[None, :, None, None] + EPS) \
        * g[None, :, None, None] + b[None, :, None, None]
    h = jnp.maximum(h, 0.0)
    h = h.reshape(h.shape[0], -1)
    return h @ wl_pt.T + bl_pt


def aux_head_packed_ref(x_nchw, params):
    """Exactly the kernel's math (same folded/bf16 params) in plain JAX."""
    N = x_nchw.shape[0]
    xf = jnp.maximum(x_nchw.reshape(N, -1).astype(jnp.bfloat16), 0)
    cdt = params['wpc'].dtype
    h1 = jnp.dot(xf, params['wpc'], preferred_element_type=jnp.float32)
    h1 = jnp.maximum(h1 + params['b1'], 0.0)
    h2 = jnp.dot(h1.astype(cdt), params['w2'],
                 preferred_element_type=jnp.float32)
    h2 = jnp.maximum(h2 + params['b2'], 0.0)
    out = jnp.dot(h2.astype(cdt), params['wl'],
                  preferred_element_type=jnp.float32) + params['bl']
    return out[:, :params['n_classes']]


if __name__ == "__main__":
    # Small, module-consistent shapes (input_size must be 7 or 8).
    N, C, INPUT_SIZE, N_CLASSES = 2, 4, 8, 10

    key = jax.random.PRNGKey(0)
    ks = jax.random.split(key, 16)

    x_nchw = jax.random.normal(ks[0], (N, C, INPUT_SIZE, INPUT_SIZE), jnp.float32)

    # Conv1: (128, C, 1, 1), no bias. BN1 over 128 channels.
    w1_pt = jax.random.normal(ks[1], (128, C, 1, 1), jnp.float32) * 0.1
    g1 = 1.0 + 0.1 * jax.random.normal(ks[2], (128,), jnp.float32)
    be1 = 0.1 * jax.random.normal(ks[3], (128,), jnp.float32)
    m1 = 0.1 * jax.random.normal(ks[4], (128,), jnp.float32)
    v1 = 0.5 + jnp.abs(jax.random.normal(ks[5], (128,), jnp.float32)) * 0.1

    # Conv2: (768, 128, 2, 2), no bias. BN2 over 768 channels.
    w2_pt = jax.random.normal(ks[6], (768, 128, 2, 2), jnp.float32) * 0.05
    g2 = 1.0 + 0.1 * jax.random.normal(ks[7], (768,), jnp.float32)
    be2 = 0.1 * jax.random.normal(ks[8], (768,), jnp.float32)
    m2 = 0.1 * jax.random.normal(ks[9], (768,), jnp.float32)
    v2 = 0.5 + jnp.abs(jax.random.normal(ks[10], (768,), jnp.float32)) * 0.1

    # Linear: weight (n_classes, 768), bias (n_classes,).
    wl_pt = jax.random.normal(ks[11], (N_CLASSES, 768), jnp.float32) * 0.05
    bl_pt = 0.1 * jax.random.normal(ks[12], (N_CLASSES,), jnp.float32)

    params = prepare_params(w1_pt, (g1, be1, m1, v1), w2_pt, (g2, be2, m2, v2),
                            wl_pt, bl_pt, input_size=INPUT_SIZE, C=C,
                            weight_dtype=jnp.bfloat16)

    # --- small batch (module-consistent shape) ---
    logits = jax.block_until_ready(aux_head_pallas(x_nchw, params))
    assert logits.shape == (N, N_CLASSES)

    # Tight check: kernel vs identical-precision (bf16) pure-JAX math.
    qref = jax.block_until_ready(aux_head_packed_ref(x_nchw, params))
    assert jnp.allclose(logits, qref, rtol=2e-3, atol=2e-3), (
        f"packed-ref max abs err {jnp.max(jnp.abs(logits - qref))}")

    # Semantic check vs full-f32 PyTorch-style reference (bf16-weight tolerance).
    ref = jax.block_until_ready(
        aux_head_reference(x_nchw, w1_pt, (g1, be1, m1, v1),
                           w2_pt, (g2, be2, m2, v2), wl_pt, bl_pt,
                           input_size=INPUT_SIZE))
    assert jnp.allclose(logits, ref, rtol=3e-2, atol=3e-2), (
        f"f32-ref max abs err {jnp.max(jnp.abs(logits - ref))}")

    # --- larger batch: exercises the multi-step "parallel" grid and the
    # unpadded partial last block (300 % 152 != 0). ---
    N2 = 300
    x2 = jax.random.normal(ks[13], (N2, C, INPUT_SIZE, INPUT_SIZE), jnp.float32)
    logits2 = jax.block_until_ready(aux_head_pallas(x2, params, block_n=512))
    qref2 = jax.block_until_ready(aux_head_packed_ref(x2, params))
    assert logits2.shape == (N2, N_CLASSES)
    assert jnp.allclose(logits2, qref2, rtol=2e-3, atol=2e-3), (
        f"batched packed-ref max abs err {jnp.max(jnp.abs(logits2 - qref2))}")

    print("KERNEL_OK")
</pallas_src>

<mosaic_0001>
module attributes {stable_mosaic.version = 11 : i64} {
  func.func @_aux_head_kernel(%arg0: i32, %arg1: memref<8x256xbf16, #tpu.memory_space<vmem>>, %arg2: memref<256x512xbf16, #tpu.memory_space<vmem>>, %arg3: memref<1x512xf32, #tpu.memory_space<vmem>>, %arg4: memref<512x768xbf16, #tpu.memory_space<vmem>>, %arg5: memref<1x768xf32, #tpu.memory_space<vmem>>, %arg6: memref<768x128xbf16, #tpu.memory_space<vmem>>, %arg7: memref<1x128xf32, #tpu.memory_space<vmem>>, %arg8: memref<8x128xf32, #tpu.memory_space<vmem>>) attributes {dimension_semantics = [#tpu.dimension_semantics<parallel>], iteration_bounds = array<i64: 1>, scalar_prefetch = 0 : i64, scratch_operands = 0 : i64, tpu.core_type = #tpu.core_type<tc>, window_params = [{transform_indices = @transform_0, window_bounds = array<i64: 8, 256>}, {pipeline_mode = #tpu.pipeline_mode<synchronous>, transform_indices = @transform_1, window_bounds = array<i64: 256, 512>}, {pipeline_mode = #tpu.pipeline_mode<synchronous>, transform_indices = @transform_2, window_bounds = array<i64: 1, 512>}, {pipeline_mode = #tpu.pipeline_mode<synchronous>, transform_indices = @transform_3, window_bounds = array<i64: 512, 768>}, {pipeline_mode = #tpu.pipeline_mode<synchronous>, transform_indices = @transform_4, window_bounds = array<i64: 1, 768>}, {pipeline_mode = #tpu.pipeline_mode<synchronous>, transform_indices = @transform_5, window_bounds = array<i64: 768, 128>}, {pipeline_mode = #tpu.pipeline_mode<synchronous>, transform_indices = @transform_6, window_bounds = array<i64: 1, 128>}, {transform_indices = @transform_7, window_bounds = array<i64: 8, 128>}]} {
    %c0 = arith.constant 0 : index
    %c0_0 = arith.constant 0 : index
    %0 = vector.load %arg1[%c0, %c0_0] : memref<8x256xbf16, #tpu.memory_space<vmem>>, vector<8x256xbf16>
    %cst = arith.constant 0.000000e+00 : bf16
    %1 = vector.broadcast %cst : bf16 to vector<8x256xbf16>
    %2 = arith.maximumf %0, %1 : vector<8x256xbf16>
    %c0_1 = arith.constant 0 : index
    %c0_2 = arith.constant 0 : index
    %3 = vector.load %arg2[%c0_1, %c0_2] : memref<256x512xbf16, #tpu.memory_space<vmem>>, vector<256x512xbf16>
    %cst_3 = arith.constant dense<0.000000e+00> : vector<8x512xf32>
    %4 = tpu.matmul %2, %3, %cst_3 {dimension_numbers = #tpu.dot_dimension_numbers<[1], [0], [0], [1], [0, 0, 1, 1], [], []>} : vector<8x256xbf16>, vector<256x512xbf16>, vector<8x512xf32> -> vector<8x512xf32>
    %c0_4 = arith.constant 0 : index
    %c0_5 = arith.constant 0 : index
    %5 = vector.load %arg3[%c0_4, %c0_5] : memref<1x512xf32, #tpu.memory_space<vmem>>, vector<1x512xf32>
    %6 = vector.broadcast %5 : vector<1x512xf32> to vector<8x512xf32>
    %7 = arith.addf %4, %6 : vector<8x512xf32>
    %cst_6 = arith.constant 0.000000e+00 : f32
    %8 = vector.broadcast %cst_6 : f32 to vector<8x512xf32>
    %9 = arith.maximumf %7, %8 : vector<8x512xf32>
    %c0_7 = arith.constant 0 : index
    %c0_8 = arith.constant 0 : index
    %10 = vector.load %arg4[%c0_7, %c0_8] : memref<512x768xbf16, #tpu.memory_space<vmem>>, vector<512x768xbf16>
    %11 = arith.truncf %9 : vector<8x512xf32> to vector<8x512xbf16>
    %cst_9 = arith.constant dense<0.000000e+00> : vector<8x768xf32>
    %12 = tpu.matmul %11, %10, %cst_9 {dimension_numbers = #tpu.dot_dimension_numbers<[1], [0], [0], [1], [0, 0, 1, 1], [], []>} : vector<8x512xbf16>, vector<512x768xbf16>, vector<8x768xf32> -> vector<8x768xf32>
    %c0_10 = arith.constant 0 : index
    %c0_11 = arith.constant 0 : index
    %13 = vector.load %arg5[%c0_10, %c0_11] : memref<1x768xf32, #tpu.memory_space<vmem>>, vector<1x768xf32>
    %14 = vector.broadcast %13 : vector<1x768xf32> to vector<8x768xf32>
    %15 = arith.addf %12, %14 : vector<8x768xf32>
    %cst_12 = arith.constant 0.000000e+00 : f32
    %16 = vector.broadcast %cst_12 : f32 to vector<8x768xf32>
    %17 = arith.maximumf %15, %16 : vector<8x768xf32>
    %c0_13 = arith.constant 0 : index
    %c0_14 = arith.constant 0 : index
    %18 = vector.load %arg6[%c0_13, %c0_14] : memref<768x128xbf16, #tpu.memory_space<vmem>>, vector<768x128xbf16>
    %19 = arith.truncf %17 : vector<8x768xf32> to vector<8x768xbf16>
    %cst_15 = arith.constant dense<0.000000e+00> : vector<8x128xf32>
    %20 = tpu.matmul %19, %18, %cst_15 {dimension_numbers = #tpu.dot_dimension_numbers<[1], [0], [0], [1], [0, 0, 1, 1], [], []>} : vector<8x768xbf16>, vector<768x128xbf16>, vector<8x128xf32> -> vector<8x128xf32>
    %c0_16 = arith.constant 0 : index
    %c0_17 = arith.constant 0 : index
    %21 = vector.load %arg7[%c0_16, %c0_17] : memref<1x128xf32, #tpu.memory_space<vmem>>, vector<1x128xf32>
    %22 = vector.broadcast %21 : vector<1x128xf32> to vector<8x128xf32>
    %23 = arith.addf %20, %22 : vector<8x128xf32>
    %c0_18 = arith.constant 0 : index
    %c0_19 = arith.constant 0 : index
    %24 = vector.load %arg8[%c0_18, %c0_19] : memref<8x128xf32, #tpu.memory_space<vmem>>, vector<8x128xf32>
    tpu.vector_store %arg8[%c0_18, %c0_19], %23 {strides = array<i32>} : memref<8x128xf32, #tpu.memory_space<vmem>>, vector<8x128xf32>,
    return
  }
  func.func @transform_0(%arg0: i32) -> (i32, i32) {
    %c0_i32 = arith.constant 0 : i32
    %c0_i32_0 = arith.constant 0 : i32
    return %arg0, %c0_i32 : i32, i32
  }
  func.func @transform_1(%arg0: i32) -> (i32, i32) {
    %c0_i32 = arith.constant 0 : i32
    %c0_i32_0 = arith.constant 0 : i32
    %c0_i32_1 = arith.constant 0 : i32
    return %c0_i32, %c0_i32_0 : i32, i32
  }
  func.func @transform_2(%arg0: i32) -> (i32, i32) {
    %c0_i32 = arith.constant 0 : i32
    %c0_i32_0 = arith.constant 0 : i32
    %c0_i32_1 = arith.constant 0 : i32
    return %c0_i32, %c0_i32_0 : i32, i32
  }
  func.func @transform_3(%arg0: i32) -> (i32, i32) {
    %c0_i32 = arith.constant 0 : i32
    %c0_i32_0 = arith.constant 0 : i32
    %c0_i32_1 = arith.constant 0 : i32
    return %c0_i32, %c0_i32_0 : i32, i32
  }
  func.func @transform_4(%arg0: i32) -> (i32, i32) {
    %c0_i32 = arith.constant 0 : i32
    %c0_i32_0 = arith.constant 0 : i32
    %c0_i32_1 = arith.constant 0 : i32
    return %c0_i32, %c0_i32_0 : i32, i32
  }
  func.func @transform_5(%arg0: i32) -> (i32, i32) {
    %c0_i32 = arith.constant 0 : i32
    %c0_i32_0 = arith.constant 0 : i32
    %c0_i32_1 = arith.constant 0 : i32
    return %c0_i32, %c0_i32_0 : i32, i32
  }
  func.func @transform_6(%arg0: i32) -> (i32, i32) {
    %c0_i32 = arith.constant 0 : i32
    %c0_i32_0 = arith.constant 0 : i32
    %c0_i32_1 = arith.constant 0 : i32
    return %c0_i32, %c0_i32_0 : i32, i32
  }
  func.func @transform_7(%arg0: i32) -> (i32, i32) {
    %c0_i32 = arith.constant 0 : i32
    %c0_i32_0 = arith.constant 0 : i32
    return %arg0, %c0_i32 : i32, i32
  }
}

</mosaic_0001>

<llo_original>
// kernel: tpu_custom_call.1
$region0: #{tpu_custom_call.1}
  #allocation0 [shape = 'u32[]', space=smem, size = 0x4, offset = 0x4, fixed_abs, tag = 'smem constant byte address 0x4 - core index']
  #allocation1 [shape = 'u32[144,128]{1,0:T(1,128)}', space=vmem, size = 0x12000, scoped, tag = 'internal scratch']
  %s0 = inlined_call_operand.hbm [shape: bf16[2,256], index: 0, kind: input, shape index: {}]
  %s1 = inlined_call_operand.hbm [shape: bf16[256,512], index: 1, kind: input, shape index: {}]
  %s2 = inlined_call_operand.vmem [shape: f32[1,512], index: 2, kind: input, shape index: {}]
  %s3 = inlined_call_operand.hbm [shape: bf16[512,768], index: 3, kind: input, shape index: {}]
  %s4 = inlined_call_operand.vmem [shape: f32[1,768], index: 4, kind: input, shape index: {}]
  %s5 = inlined_call_operand.hbm [shape: bf16[768,128], index: 5, kind: input, shape index: {}]
  %s6 = inlined_call_operand.vmem [shape: f32[1,128], index: 6, kind: input, shape index: {}]
  %s7 = inlined_call_operand.hbm [shape: f32[2,128], index: 7, kind: output, shape index: {}]
  %s8 = sld [smem:[#allocation0]]
  $region54: #{tpu_custom_call.1} parent=0
    _
  %s10 = ssub.s32 1, %s8
  %s11 = scalar_select 0, %s10, %s8
  $region1: #{tpu_custom_call.1} parent=0
    #allocation2 [shape = 'u8[4096]{0}', space=vmem, size = 0x1000, scoped, tag = 'input window, operand 0, single buffered']
    #allocation3 [shape = 's32[1]{0}', space=sflag, size = 0x4, scoped, tag = 'scoped memory for tpu_custom_call.1']
    #allocation4 [shape = 's32[1]{0}', space=sflag, size = 0x4, scoped, tag = 'scoped memory for tpu_custom_call.1']
    #allocation5 [shape = 'u8[262144]{0}', space=vmem, size = 0x40000, scoped, tag = 'input window, operand 1, single buffered']
    #allocation6 [shape = 's32[1]{0}', space=sflag, size = 0x4, scoped, tag = 'scoped memory for tpu_custom_call.1']
    #allocation7 [shape = 'u8[786432]{0}', space=vmem, size = 0xc0000, scoped, tag = 'input window, operand 3, single buffered']
    #allocation8 [shape = 'u8[196608]{0}', space=vmem, size = 0x30000, scoped, tag = 'input window, operand 5, single buffered']
    #allocation9 [shape = 's32[1]{0}', space=sflag, size = 0x4, scoped, tag = 'scoped memory for tpu_custom_call.1']
    #allocation10 [shape = 'u8[4096]{0}', space=vmem, size = 0x1000, scoped, tag = 'output window, operand 0, single buffered']
    %12 = vsyncpa [#allocation3], 0
    %13 = vsyncpa [#allocation6], 0
    %14 = vsyncpa [#allocation9], 0
    %15 = vsyncpa [#allocation4], 0
    // Predicated region
    $region2: #{tpu_custom_call.1} parent=1 // pred_check
      _
    $region3: #{tpu_custom_call.1} parent=1 // pred_check_branch
      %17 = sbr.rel (0) target = $region5
    $region4: #{tpu_custom_call.1} parent=1 // pred_region
      %s19 = ssub.s32 128, 32
      %20 = vsyncadd [#allocation3], %s19
      %s21 = sshll.u32 [#allocation2], 4
      %s22 = int_to_ptr.vmem [resolvable:$true] %s21
      %27 = dma.hbm_to_vmem [thread:$0]  %s0, 32, %s22, [#allocation3], 32, 32, 2
    $region5: #{tpu_custom_call.1} parent=1 // pred_fallthru
      _
    // Predicated region
    $region6: #{tpu_custom_call.1} parent=1 // pred_check
      _
    $region7: #{tpu_custom_call.1} parent=1 // pred_check_branch
      %29 = sbr.rel (0) target = $region9
    $region8: #{tpu_custom_call.1} parent=1 // pred_region
      %s31 = ssub.s32 8192, 8192
      %32 = vsyncadd [#allocation6], %s31
      %s33 = sshll.u32 [#allocation5], 4
      %s34 = int_to_ptr.vmem [resolvable:$true] %s33
      %39 = dma.hbm_to_vmem [thread:$0]  %s1, 8192, %s34, [#allocation6], 256, 256, 16
    $region9: #{tpu_custom_call.1} parent=1 // pred_fallthru
      _
    // Predicated region
    $region10: #{tpu_custom_call.1} parent=1 // pred_check
      _
    $region11: #{tpu_custom_call.1} parent=1 // pred_check_branch
      %41 = sbr.rel (0) target = $region13
    $region12: #{tpu_custom_call.1} parent=1 // pred_region
      _
    $region13: #{tpu_custom_call.1} parent=1 // pred_fallthru
      _
    // Predicated region
    $region14: #{tpu_custom_call.1} parent=1 // pred_check
      _
    $region15: #{tpu_custom_call.1} parent=1 // pred_check_branch
      %43 = sbr.rel (0) target = $region17
    $region16: #{tpu_custom_call.1} parent=1 // pred_region
      %s45 = ssub.s32 24576, 24576
      %46 = vsyncadd [#allocation6], %s45
      %s47 = sshll.u32 [#allocation7], 4
      %s48 = int_to_ptr.vmem [resolvable:$true] %s47
      %53 = dma.hbm_to_vmem [thread:$0]  %s3, 24576, %s48, [#allocation6], 384, 384, 24
    $region17: #{tpu_custom_call.1} parent=1 // pred_fallthru
      _
    // Predicated region
    $region18: #{tpu_custom_call.1} parent=1 // pred_check
      _
    $region19: #{tpu_custom_call.1} parent=1 // pred_check_branch
      %55 = sbr.rel (0) target = $region21
    $region20: #{tpu_custom_call.1} parent=1 // pred_region
      _
    $region21: #{tpu_custom_call.1} parent=1 // pred_fallthru
      _
    // Predicated region
    $region22: #{tpu_custom_call.1} parent=1 // pred_check
      _
    $region23: #{tpu_custom_call.1} parent=1 // pred_check_branch
      %57 = sbr.rel (0) target = $region25
    $region24: #{tpu_custom_call.1} parent=1 // pred_region
      %s59 = ssub.s32 6144, 6144
      %60 = vsyncadd [#allocation9], %s59
      %s61 = sshll.u32 [#allocation8], 4
      %s62 = int_to_ptr.vmem [resolvable:$true] %s61
      %67 = dma.hbm_to_vmem [thread:$0]  %s5, 6144, %s62, [#allocation9], 64, 64, 4
    $region25: #{tpu_custom_call.1} parent=1 // pred_fallthru
      _
    // Predicated region
    $region26: #{tpu_custom_call.1} parent=1 // pred_check
      _
    $region27: #{tpu_custom_call.1} parent=1 // pred_check_branch
      %69 = sbr.rel (0) target = $region29
    $region28: #{tpu_custom_call.1} parent=1 // pred_region
      _
    $region29: #{tpu_custom_call.1} parent=1 // pred_fallthru
      _
    // Predicated region
    $region30: #{tpu_custom_call.1} parent=1 // pred_check
      _
    $region31: #{tpu_custom_call.1} parent=1 // pred_check_branch
      %71 = sbr.rel (0) target = $region33
    $region32: #{tpu_custom_call.1} parent=1 // pred_region
      %72 = dma.done [#allocation3], 128
    $region33: #{tpu_custom_call.1} parent=1 // pred_fallthru
      _
    // Predicated region
    $region34: #{tpu_custom_call.1} parent=1 // pred_check
      _
    $region35: #{tpu_custom_call.1} parent=1 // pred_check_branch
      %74 = sbr.rel (0) target = $region37
    $region36: #{tpu_custom_call.1} parent=1 // pred_region
      %75 = dma.done [#allocation6], 8192
    $region37: #{tpu_custom_call.1} parent=1 // pred_fallthru
      _
    // Predicated region
    $region38: #{tpu_custom_call.1} parent=1 // pred_check
      _
    $region39: #{tpu_custom_call.1} parent=1 // pred_check_branch
      %77 = sbr.rel (0) target = $region41
    $region40: #{tpu_custom_call.1} parent=1 // pred_region
      %78 = dma.done [#allocation6], 24576
    $region41: #{tpu_custom_call.1} parent=1 // pred_fallthru
      _
    // Predicated region
    $region42: #{tpu_custom_call.1} parent=1 // pred_check
      _
    $region43: #{tpu_custom_call.1} parent=1 // pred_check_branch
      %80 = sbr.rel (0) target = $region45
    $region44: #{tpu_custom_call.1} parent=1 // pred_region
      %81 = dma.done [#allocation9], 6144
    $region45: #{tpu_custom_call.1} parent=1 // pred_fallthru
      _
    %v83 = vld [vmem:[#allocation2] sm:$0x3]
    %v84 = vld [vmem:[#allocation2 + $0x2] sm:$0x3]
    %v85 = vld [vmem:[#allocation2 + $0x4] sm:$0x3]
    %v86 = vld [vmem:[#allocation2 + $0x6] sm:$0x3]
    %v87 = vmax.bf16 %v83, 0
    %v88 = vmax.bf16 %v84, 0
    %v89 = vmax.bf16 %v85, 0
    %v90 = vmax.bf16 %v86, 0
    %v91 = vld [vmem:[#allocation5] sm:$0xff]
    %v92 = vld [vmem:[#allocation5 + $0x8] sm:$0xff]
    %v93 = vld [vmem:[#allocation5 + $0x10] sm:$0xff]
    %v94 = vld [vmem:[#allocation5 + $0x18] sm:$0xff]
    %v95 = vld [vmem:[#allocation5 + $0x20] sm:$0xff]
    %v96 = vld [vmem:[#allocation5 + $0x28] sm:$0xff]
    %v97 = vld [vmem:[#allocation5 + $0x30] sm:$0xff]
    %v98 = vld [vmem:[#allocation5 + $0x38] sm:$0xff]
    %v99 = vld [vmem:[#allocation5 + $0x40] sm:$0xff]
    %v100 = vld [vmem:[#allocation5 + $0x48] sm:$0xff]
    %v101 = vld [vmem:[#allocation5 + $0x50] sm:$0xff]
    %v102 = vld [vmem:[#allocation5 + $0x58] sm:$0xff]
    %v103 = vld [vmem:[#allocation5 + $0x60] sm:$0xff]
    %v104 = vld [vmem:[#allocation5 + $0x68] sm:$0xff]
    %v105 = vld [vmem:[#allocation5 + $0x70] sm:$0xff]
    %v106 = vld [vmem:[#allocation5 + $0x78] sm:$0xff]
    %v107 = vld [vmem:[#allocation5 + $0x80] sm:$0xff]
    %v108 = vld [vmem:[#allocation5 + $0x88] sm:$0xff]
    %v109 = vld [vmem:[#allocation5 + $0x90] sm:$0xff]
    %v110 = vld [vmem:[#allocation5 + $0x98] sm:$0xff]
    %v111 = vld [vmem:[#allocation5 + $0xa0] sm:$0xff]
    %v112 = vld [vmem:[#allocation5 + $0xa8] sm:$0xff]
    %v113 = vld [vmem:[#allocation5 + $0xb0] sm:$0xff]
    %v114 = vld [vmem:[#allocation5 + $0xb8] sm:$0xff]
    %v115 = vld [vmem:[#allocation5 + $0xc0] sm:$0xff]
    %v116 = vld [vmem:[#allocation5 + $0xc8] sm:$0xff]
    %v117 = vld [vmem:[#allocation5 + $0xd0] sm:$0xff]
    %v118 = vld [vmem:[#allocation5 + $0xd8] sm:$0xff]
    %v119 = vld [vmem:[#allocation5 + $0xe0] sm:$0xff]
    %v120 = vld [vmem:[#allocation5 + $0xe8] sm:$0xff]
    %v121 = vld [vmem:[#allocation5 + $0xf0] sm:$0xff]
    %v122 = vld [vmem:[#allocation5 + $0xf8] sm:$0xff]
    %v123 = vld [vmem:[#allocation5 + $0x100] sm:$0xff]
    %v124 = vld [vmem:[#allocation5 + $0x108] sm:$0xff]
    %v125 = vld [vmem:[#allocation5 + $0x110] sm:$0xff]
    %v126 = vld [vmem:[#allocation5 + $0x118] sm:$0xff]
    %v127 = vld [vmem:[#allocation5 + $0x120] sm:$0xff]
    %v128 = vld [vmem:[#allocation5 + $0x128] sm:$0xff]
    %v129 = vld [vmem:[#allocation5 + $0x130] sm:$0xff]
    %v130 = vld [vmem:[#allocation5 + $0x138] sm:$0xff]
    %v131 = vld [vmem:[#allocation5 + $0x140] sm:$0xff]
    %v132 = vld [vmem:[#allocation5 + $0x148] sm:$0xff]
    %v133 = vld [vmem:[#allocation5 + $0x150] sm:$0xff]
    %v134 = vld [vmem:[#allocation5 + $0x158] sm:$0xff]
    %v135 = vld [vmem:[#allocation5 + $0x160] sm:$0xff]
    %v136 = vld [vmem:[#allocation5 + $0x168] sm:$0xff]
    %v137 = vld [vmem:[#allocation5 + $0x170] sm:$0xff]
    %v138 = vld [vmem:[#allocation5 + $0x178] sm:$0xff]
    %v139 = vld [vmem:[#allocation5 + $0x180] sm:$0xff]
    %v140 = vld [vmem:[#allocation5 + $0x188] sm:$0xff]
    %v141 = vld [vmem:[#allocation5 + $0x190] sm:$0xff]
    %v142 = vld [vmem:[#allocation5 + $0x198] sm:$0xff]
    %v143 = vld [vmem:[#allocation5 + $0x1a0] sm:$0xff]
    %v144 = vld [vmem:[#allocation5 + $0x1a8] sm:$0xff]
    %v145 = vld [vmem:[#allocation5 + $0x1b0] sm:$0xff]
    %v146 = vld [vmem:[#allocation5 + $0x1b8] sm:$0xff]
    %v147 = vld [vmem:[#allocation5 + $0x1c0] sm:$0xff]
    %v148 = vld [vmem:[#allocation5 + $0x1c8] sm:$0xff]
    %v149 = vld [vmem:[#allocation5 + $0x1d0] sm:$0xff]
    %v150 = vld [vmem:[#allocation5 + $0x1d8] sm:$0xff]
    %v151 = vld [vmem:[#allocation5 + $0x1e0] sm:$0xff]
    %v152 = vld [vmem:[#allocation5 + $0x1e8] sm:$0xff]
    %v153 = vld [vmem:[#allocation5 + $0x1f0] sm:$0xff]
    %v154 = vld [vmem:[#allocation5 + $0x1f8] sm:$0xff]
    %v155 = vld [vmem:[%s2] sm:$0xf]
    %v157 = vlaneseq
    %v158 = vshrl.u32 %v157, 7
    %v159 = vsub.s32 0, %v158
    %v160 = vrot.slane %v155, %v159
    %v161 = vlaneseq
    %v162 = vshrl.u32 %v161, 7
    %v163 = vsub.s32 1, %v162
    %v164 = vrot.slane %v155, %v163
    %v165 = vlaneseq
    %v166 = vshrl.u32 %v165, 7
    %v167 = vsub.s32 2, %v166
    %v168 = vrot.slane %v155, %v167
    %v169 = vlaneseq
    %v170 = vshrl.u32 %v169, 7
    %v171 = vsub.s32 3, %v170
    %v172 = vrot.slane %v155, %v171
    %v181 = vcombine.low %v87, %v88
    %v182 = vcombine.low %v89, %v90
    %v184 = vunpack.c.l.s4 1966171168
    %v185 = vunpack.c.0.s8 %v184
    %v186 = vlaneseq
    %v187 = vshrl.u32 %v186, 7
    %v188 = vsub.s32 %v185, %v187
    %v189 = vrot.slane %v181, %v188
    %v191 = vunpack.c.l.s4 1966171168
    %v192 = vunpack.c.0.s8 %v191
    %v193 = vlaneseq
    %v194 = vshrl.u32 %v193, 7
    %v195 = vsub.s32 %v192, %v194
    %v196 = vrot.slane %v182, %v195
    %v197 = vcombine.low %v189, %v196
    %v198 = vcombine.high %v189, %v196
    %v200 = vunpack.c.l.s4 1966171168
    %v201 = vunpack.c.0.s8 %v200
    %v202 = vlaneseq
    %v203 = vshrl.u32 %v202, 7
    %v204 = vsub.s32 %v201, %v203
    %v205 = vrot.slane %v197, %v204
    %v207 = vunpack.c.l.s4 1966171168
    %v208 = vunpack.c.0.s8 %v207
    %v209 = vlaneseq
    %v210 = vshrl.u32 %v209, 7
    %v211 = vsub.s32 %v208, %v210
    %v212 = vrot.slane %v198, %v211
    %v279 = vunpack.c.l.b16 %v91
    %v280 = vunpack.c.h.b16 %v91
    %v281 = vunpack.c.l.b16 %v92
    %v282 = vunpack.c.h.b16 %v92
    %v283 = vunpack.c.l.b16 %v93
    %v284 = vunpack.c.h.b16 %v93
    %v285 = vunpack.c.l.b16 %v94
    %v286 = vunpack.c.h.b16 %v94
    %v287 = vunpack.c.l.b16 %v95
    %v288 = vunpack.c.h.b16 %v95
    %v289 = vunpack.c.l.b16 %v96
    %v290 = vunpack.c.h.b16 %v96
    %v291 = vunpack.c.l.b16 %v97
    %v292 = vunpack.c.h.b16 %v97
    %v293 = vunpack.c.l.b16 %v98
    %v294 = vunpack.c.h.b16 %v98
    %v295 = vunpack.c.l.b16 %v99
    %v296 = vunpack.c.h.b16 %v99
    %v297 = vunpack.c.l.b16 %v100
    %v298 = vunpack.c.h.b16 %v100
    %v299 = vunpack.c.l.b16 %v101
    %v300 = vunpack.c.h.b16 %v101
    %v301 = vunpack.c.l.b16 %v102
    %v302 = vunpack.c.h.b16 %v102
    %v303 = vunpack.c.l.b16 %v103
    %v304 = vunpack.c.h.b16 %v103
    %v305 = vunpack.c.l.b16 %v104
    %v306 = vunpack.c.h.b16 %v104
    %v307 = vunpack.c.l.b16 %v105
    %v308 = vunpack.c.h.b16 %v105
    %v309 = vunpack.c.l.b16 %v106
    %v310 = vunpack.c.h.b16 %v106
    %v311 = vunpack.c.l.b16 %v107
    %v312 = vunpack.c.h.b16 %v107
    %v313 = vunpack.c.l.b16 %v108
    %v314 = vunpack.c.h.b16 %v108
    %v315 = vunpack.c.l.b16 %v109
    %v316 = vunpack.c.h.b16 %v109
    %v317 = vunpack.c.l.b16 %v110
    %v318 = vunpack.c.h.b16 %v110
    %v319 = vunpack.c.l.b16 %v111
    %v320 = vunpack.c.h.b16 %v111
    %v321 = vunpack.c.l.b16 %v112
    %v322 = vunpack.c.h.b16 %v112
    %v323 = vunpack.c.l.b16 %v113
    %v324 = vunpack.c.h.b16 %v113
    %v325 = vunpack.c.l.b16 %v114
    %v326 = vunpack.c.h.b16 %v114
    %v327 = vunpack.c.l.b16 %v115
    %v328 = vunpack.c.h.b16 %v115
    %v329 = vunpack.c.l.b16 %v116
    %v330 = vunpack.c.h.b16 %v116
    %v331 = vunpack.c.l.b16 %v117
    %v332 = vunpack.c.h.b16 %v117
    %v333 = vunpack.c.l.b16 %v118
    %v334 = vunpack.c.h.b16 %v118
    %v335 = vunpack.c.l.b16 %v119
    %v336 = vunpack.c.h.b16 %v119
    %v337 = vunpack.c.l.b16 %v120
    %v338 = vunpack.c.h.b16 %v120
    %v339 = vunpack.c.l.b16 %v121
    %v340 = vunpack.c.h.b16 %v121
    %v341 = vunpack.c.l.b16 %v122
    %v342 = vunpack.c.h.b16 %v122
    %v343 = vunpack.c.l.b16 %v123
    %v344 = vunpack.c.h.b16 %v123
    %v345 = vunpack.c.l.b16 %v124
    %v346 = vunpack.c.h.b16 %v124
    %v347 = vunpack.c.l.b16 %v125
    %v348 = vunpack.c.h.b16 %v125
    %v349 = vunpack.c.l.b16 %v126
    %v350 = vunpack.c.h.b16 %v126
    %v351 = vunpack.c.l.b16 %v127
    %v352 = vunpack.c.h.b16 %v127
    %v353 = vunpack.c.l.b16 %v128
    %v354 = vunpack.c.h.b16 %v128
    %v355 = vunpack.c.l.b16 %v129
    %v356 = vunpack.c.h.b16 %v129
    %v357 = vunpack.c.l.b16 %v130
    %v358 = vunpack.c.h.b16 %v130
    %v359 = vunpack.c.l.b16 %v131
    %v360 = vunpack.c.h.b16 %v131
    %v361 = vunpack.c.l.b16 %v132
    %v362 = vunpack.c.h.b16 %v132
    %v363 = vunpack.c.l.b16 %v133
    %v364 = vunpack.c.h.b16 %v133
    %v365 = vunpack.c.l.b16 %v134
    %v366 = vunpack.c.h.b16 %v134
    %v367 = vunpack.c.l.b16 %v135
    %v368 = vunpack.c.h.b16 %v135
    %v369 = vunpack.c.l.b16 %v136
    %v370 = vunpack.c.h.b16 %v136
    %v371 = vunpack.c.l.b16 %v137
    %v372 = vunpack.c.h.b16 %v137
    %v373 = vunpack.c.l.b16 %v138
    %v374 = vunpack.c.h.b16 %v138
    %v375 = vunpack.c.l.b16 %v139
    %v376 = vunpack.c.h.b16 %v139
    %v377 = vunpack.c.l.b16 %v140
    %v378 = vunpack.c.h.b16 %v140
    %v379 = vunpack.c.l.b16 %v141
    %v380 = vunpack.c.h.b16 %v141
    %v381 = vunpack.c.l.b16 %v142
    %v382 = vunpack.c.h.b16 %v142
    %v383 = vunpack.c.l.b16 %v143
    %v384 = vunpack.c.h.b16 %v143
    %v385 = vunpack.c.l.b16 %v144
    %v386 = vunpack.c.h.b16 %v144
    %v387 = vunpack.c.l.b16 %v145
    %v388 = vunpack.c.h.b16 %v145
    %v389 = vunpack.c.l.b16 %v146
    %v390 = vunpack.c.h.b16 %v146
    %v391 = vunpack.c.l.b16 %v147
    %v392 = vunpack.c.h.b16 %v147
    %v393 = vunpack.c.l.b16 %v148
    %v394 = vunpack.c.h.b16 %v148
    %v395 = vunpack.c.l.b16 %v149
    %v396 = vunpack.c.h.b16 %v149
    %v397 = vunpack.c.l.b16 %v150
    %v398 = vunpack.c.h.b16 %v150
    %v399 = vunpack.c.l.b16 %v151
    %v400 = vunpack.c.h.b16 %v151
    %v401 = vunpack.c.l.b16 %v152
    %v402 = vunpack.c.h.b16 %v152
    %v403 = vunpack.c.l.b16 %v153
    %v404 = vunpack.c.h.b16 %v153
    %v405 = vunpack.c.l.b16 %v154
    %v406 = vunpack.c.h.b16 %v154
    %v407 = vpack.c.b16 %v283, %v279
    %v408 = vpack.c.b16 %v284, %v280
    %v409 = vpack.c.b16 %v285, %v281
    %v410 = vpack.c.b16 %v286, %v282
    %v411 = vpack.c.b16 %v291, %v287
    %v412 = vpack.c.b16 %v292, %v288
    %v413 = vpack.c.b16 %v293, %v289
    %v414 = vpack.c.b16 %v294, %v290
    %v415 = vpack.c.b16 %v299, %v295
    %v416 = vpack.c.b16 %v300, %v296
    %v417 = vpack.c.b16 %v301, %v297
    %v418 = vpack.c.b16 %v302, %v298
    %v419 = vpack.c.b16 %v307, %v303
    %v420 = vpack.c.b16 %v308, %v304
    %v421 = vpack.c.b16 %v309, %v305
    %v422 = vpack.c.b16 %v310, %v306
    %v423 = vpack.c.b16 %v315, %v311
    %v424 = vpack.c.b16 %v316, %v312
    %v425 = vpack.c.b16 %v317, %v313
    %v426 = vpack.c.b16 %v318, %v314
    %v427 = vpack.c.b16 %v323, %v319
    %v428 = vpack.c.b16 %v324, %v320
    %v429 = vpack.c.b16 %v325, %v321
    %v430 = vpack.c.b16 %v326, %v322
    %v431 = vpack.c.b16 %v331, %v327
    %v432 = vpack.c.b16 %v332, %v328
    %v433 = vpack.c.b16 %v333, %v329
    %v434 = vpack.c.b16 %v334, %v330
    %v435 = vpack.c.b16 %v339, %v335
    %v436 = vpack.c.b16 %v340, %v336
    %v437 = vpack.c.b16 %v341, %v337
    %v438 = vpack.c.b16 %v342, %v338
    %v439 = vpack.c.b16 %v347, %v343
    %v440 = vpack.c.b16 %v348, %v344
    %v441 = vpack.c.b16 %v349, %v345
    %v442 = vpack.c.b16 %v350, %v346
    %v443 = vpack.c.b16 %v355, %v351
    %v444 = vpack.c.b16 %v356, %v352
    %v445 = vpack.c.b16 %v357, %v353
    %v446 = vpack.c.b16 %v358, %v354
    %v447 = vpack.c.b16 %v363, %v359
    %v448 = vpack.c.b16 %v364, %v360
    %v449 = vpack.c.b16 %v365, %v361
    %v450 = vpack.c.b16 %v366, %v362
    %v451 = vpack.c.b16 %v371, %v367
    %v452 = vpack.c.b16 %v372, %v368
    %v453 = vpack.c.b16 %v373, %v369
    %v454 = vpack.c.b16 %v374, %v370
    %v455 = vpack.c.b16 %v379, %v375
    %v456 = vpack.c.b16 %v380, %v376
    %v457 = vpack.c.b16 %v381, %v377
    %v458 = vpack.c.b16 %v382, %v378
    %v459 = vpack.c.b16 %v387, %v383
    %v460 = vpack.c.b16 %v388, %v384
    %v461 = vpack.c.b16 %v389, %v385
    %v462 = vpack.c.b16 %v390, %v386
    %v463 = vpack.c.b16 %v395, %v391
    %v464 = vpack.c.b16 %v396, %v392
    %v465 = vpack.c.b16 %v397, %v393
    %v466 = vpack.c.b16 %v398, %v394
    %v467 = vpack.c.b16 %v403, %v399
    %v468 = vpack.c.b16 %v404, %v400
    %v469 = vpack.c.b16 %v405, %v401
    %v470 = vpack.c.b16 %v406, %v402
    %535 = vmatprep.subr.bf16.mxu0 %v408
    %536 = vmatpush1.bf16.msra.mxu0 %v407
    %537 = vmatprep.subr.bf16.mxu0 %v412
    %538 = vmatpush1.bf16.msra.mxu0 %v411
    %539 = vmatprep.subr.bf16.mxu0 %v416
    %540 = vmatpush1.bf16.msra.mxu0 %v415
    %541 = vmatprep.subr.bf16.mxu0 %v420
    %542 = vmatpush1.bf16.msra.mxu0 %v419
    %543 = vmatprep.subr.bf16.mxu0 %v424
    %544 = vmatpush1.bf16.msra.mxu0 %v423
    %545 = vmatprep.subr.bf16.mxu0 %v428
    %546 = vmatpush1.bf16.msra.mxu0 %v427
    %547 = vmatprep.subr.bf16.mxu0 %v432
    %548 = vmatpush1.bf16.msra.mxu0 %v431
    %549 = vmatprep.subr.bf16.mxu0 %v436
    %550 = vmatpush1.bf16.msra.mxu0 %v435
    %551 = vmatprep.subr.bf16.mxu0 %v440
    %552 = vmatpush1.bf16.msra.mxu0 %v439
    %553 = vmatprep.subr.bf16.mxu0 %v444
    %554 = vmatpush1.bf16.msra.mxu0 %v443
    %555 = vmatprep.subr.bf16.mxu0 %v448
    %556 = vmatpush1.bf16.msra.mxu0 %v447
    %557 = vmatprep.subr.bf16.mxu0 %v452
    %558 = vmatpush1.bf16.msra.mxu0 %v451
    %559 = vmatprep.subr.bf16.mxu0 %v456
    %560 = vmatpush1.bf16.msra.mxu0 %v455
    %561 = vmatprep.subr.bf16.mxu0 %v460
    %562 = vmatpush1.bf16.msra.mxu0 %v459
    %563 = vmatprep.subr.bf16.mxu0 %v464
    %564 = vmatpush1.bf16.msra.mxu0 %v463
    %565 = vmatprep.subr.bf16.mxu0 %v468
    %566 = vmatpush1.bf16.msra.mxu0 %v467
    %567 = vmatprep.mubr.bf16.mxu0 %v212
    %568 = vmatmul.mubr.bf16.gmra.mrb[0].mxu0 %v205
    %v569 = vpop.f32.mrb[0].mxu0
    %v570 = vadd.f32 %v160, %v569
    %v571 = vpop.f32.mrb[0].mxu0
    %v572 = vadd.f32 %v164, %v571
    %v573 = vpop.f32.mrb[0].mxu0
    %v574 = vpop.f32.mrb[0].mxu0
    %575 = vdwg.mxu0
    %576 = vmatprep.subr.bf16.mxu0 %v410
    %577 = vmatpush1.bf16.msra.mxu0 %v409
    %578 = vmatprep.subr.bf16.mxu0 %v414
    %579 = vmatpush1.bf16.msra.mxu0 %v413
    %580 = vmatprep.subr.bf16.mxu0 %v418
    %581 = vmatpush1.bf16.msra.mxu0 %v417
    %582 = vmatprep.subr.bf16.mxu0 %v422
    %583 = vmatpush1.bf16.msra.mxu0 %v421
    %584 = vmatprep.subr.bf16.mxu0 %v426
    %585 = vmatpush1.bf16.msra.mxu0 %v425
    %586 = vmatprep.subr.bf16.mxu0 %v430
    %587 = vmatpush1.bf16.msra.mxu0 %v429
    %588 = vmatprep.subr.bf16.mxu0 %v434
    %589 = vmatpush1.bf16.msra.mxu0 %v433
    %590 = vmatprep.subr.bf16.mxu0 %v438
    %591 = vmatpush1.bf16.msra.mxu0 %v437
    %592 = vmatprep.subr.bf16.mxu0 %v442
    %593 = vmatpush1.bf16.msra.mxu0 %v441
    %594 = vmatprep.subr.bf16.mxu0 %v446
    %595 = vmatpush1.bf16.msra.mxu0 %v445
    %596 = vmatprep.subr.bf16.mxu0 %v450
    %597 = vmatpush1.bf16.msra.mxu0 %v449
    %598 = vmatprep.subr.bf16.mxu0 %v454
    %599 = vmatpush1.bf16.msra.mxu0 %v453
    %600 = vmatprep.subr.bf16.mxu0 %v458
    %601 = vmatpush1.bf16.msra.mxu0 %v457
    %602 = vmatprep.subr.bf16.mxu0 %v462
    %603 = vmatpush1.bf16.msra.mxu0 %v461
    %604 = vmatprep.subr.bf16.mxu0 %v466
    %605 = vmatpush1.bf16.msra.mxu0 %v465
    %606 = vmatprep.subr.bf16.mxu0 %v470
    %607 = vmatpush1.bf16.msra.mxu0 %v469
    %608 = vmatprep.mubr.bf16.mxu0 %v212
    %609 = vmatmul.mubr.bf16.gmra.mrb[0].mxu0 %v205
    %v610 = vpop.f32.mrb[0].mxu0
    %v611 = vadd.f32 %v168, %v610
    %v612 = vpop.f32.mrb[0].mxu0
    %v613 = vadd.f32 %v172, %v612
    %v614 = vpop.f32.mrb[0].mxu0
    %v615 = vpop.f32.mrb[0].mxu0
    %616 = vdwg.mxu0
    %v617 = vmax.f32 %v570, 0.0
    %v618 = vmax.f32 %v572, 0.0
    %v619 = vmax.f32 %v611, 0.0
    %v620 = vmax.f32 %v613, 0.0
    %v621 = vld [vmem:[#allocation7] sm:$0xff]
    %v622 = vld [vmem:[#allocation7 + $0x8] sm:$0xff]
    %v623 = vld [vmem:[#allocation7 + $0x10] sm:$0xff]
    %v624 = vld [vmem:[#allocation7 + $0x18] sm:$0xff]
    %v625 = vld [vmem:[#allocation7 + $0x20] sm:$0xff]
    %v626 = vld [vmem:[#allocation7 + $0x28] sm:$0xff]
    %v627 = vld [vmem:[#allocation7 + $0x30] sm:$0xff]
    %v628 = vld [vmem:[#allocation7 + $0x38] sm:$0xff]
    %v629 = vld [vmem:[#allocation7 + $0x40] sm:$0xff]
    %v630 = vld [vmem:[#allocation7 + $0x48] sm:$0xff]
    %v631 = vld [vmem:[#allocation7 + $0x50] sm:$0xff]
    %v632 = vld [vmem:[#allocation7 + $0x58] sm:$0xff]
    %v633 = vld [vmem:[#allocation7 + $0x60] sm:$0xff]
    %v634 = vld [vmem:[#allocation7 + $0x68] sm:$0xff]
    %v635 = vld [vmem:[#allocation7 + $0x70] sm:$0xff]
    %v636 = vld [vmem:[#allocation7 + $0x78] sm:$0xff]
    %v637 = vld [vmem:[#allocation7 + $0x80] sm:$0xff]
    %v638 = vld [vmem:[#allocation7 + $0x88] sm:$0xff]
    %v639 = vld [vmem:[#allocation7 + $0x90] sm:$0xff]
    %v640 = vld [vmem:[#allocation7 + $0x98] sm:$0xff]
    %v641 = vld [vmem:[#allocation7 + $0xa0] sm:$0xff]
    %v642 = vld [vmem:[#allocation7 + $0xa8] sm:$0xff]
    %v643 = vld [vmem:[#allocation7 + $0xb0] sm:$0xff]
    %v644 = vld [vmem:[#allocation7 + $0xb8] sm:$0xff]
    %v645 = vld [vmem:[#allocation7 + $0xc0] sm:$0xff]
    %v646 = vld [vmem:[#allocation7 + $0xc8] sm:$0xff]
    %v647 = vld [vmem:[#allocation7 + $0xd0] sm:$0xff]
    %v648 = vld [vmem:[#allocation7 + $0xd8] sm:$0xff]
    %v649 = vld [vmem:[#allocation7 + $0xe0] sm:$0xff]
    %v650 = vld [vmem:[#allocation7 + $0xe8] sm:$0xff]
    %v651 = vld [vmem:[#allocation7 + $0xf0] sm:$0xff]
    %v652 = vld [vmem:[#allocation7 + $0xf8] sm:$0xff]
    %v653 = vld [vmem:[#allocation7 + $0x100] sm:$0xff]
    %v654 = vld [vmem:[#allocation7 + $0x108] sm:$0xff]
    %v655 = vld [vmem:[#allocation7 + $0x110] sm:$0xff]
    %v656 = vld [vmem:[#allocation7 + $0x118] sm:$0xff]
    %v657 = vld [vmem:[#allocation7 + $0x120] sm:$0xff]
    %v658 = vld [vmem:[#allocation7 + $0x128] sm:$0xff]
    %v659 = vld [vmem:[#allocation7 + $0x130] sm:$0xff]
    %v660 = vld [vmem:[#allocation7 + $0x138] sm:$0xff]
    %v661 = vld [vmem:[#allocation7 + $0x140] sm:$0xff]
    %v662 = vld [vmem:[#allocation7 + $0x148] sm:$0xff]
    %v663 = vld [vmem:[#allocation7 + $0x150] sm:$0xff]
    %v664 = vld [vmem:[#allocation7 + $0x158] sm:$0xff]
    %v665 = vld [vmem:[#allocation7 + $0x160] sm:$0xff]
    %v666 = vld [vmem:[#allocation7 + $0x168] sm:$0xff]
    %v667 = vld [vmem:[#allocation7 + $0x170] sm:$0xff]
    %v668 = vld [vmem:[#allocation7 + $0x178] sm:$0xff]
    %v669 = vld [vmem:[#allocation7 + $0x180] sm:$0xff]
    %v670 = vld [vmem:[#allocation7 + $0x188] sm:$0xff]
    %v671 = vld [vmem:[#allocation7 + $0x190] sm:$0xff]
    %v672 = vld [vmem:[#allocation7 + $0x198] sm:$0xff]
    %v673 = vld [vmem:[#allocation7 + $0x1a0] sm:$0xff]
    %v674 = vld [vmem:[#allocation7 + $0x1a8] sm:$0xff]
    %v675 = vld [vmem:[#allocation7 + $0x1b0] sm:$0xff]
    %v676 = vld [vmem:[#allocation7 + $0x1b8] sm:$0xff]
    %v677 = vld [vmem:[#allocation7 + $0x1c0] sm:$0xff]
    %v678 = vld [vmem:[#allocation7 + $0x1c8] sm:$0xff]
    %v679 = vld [vmem:[#allocation7 + $0x1d0] sm:$0xff]
    %v680 = vld [vmem:[#allocation7 + $0x1d8] sm:$0xff]
    %v681 = vld [vmem:[#allocation7 + $0x1e0] sm:$0xff]
    %v682 = vld [vmem:[#allocation7 + $0x1e8] sm:$0xff]
    %v683 = vld [vmem:[#allocation7 + $0x1f0] sm:$0xff]
    %v684 = vld [vmem:[#allocation7 + $0x1f8] sm:$0xff]
    %v685 = vld [vmem:[#allocation7 + $0x200] sm:$0xff]
    %v686 = vld [vmem:[#allocation7 + $0x208] sm:$0xff]
    %v687 = vld [vmem:[#allocation7 + $0x210] sm:$0xff]
    %v688 = vld [vmem:[#allocation7 + $0x218] sm:$0xff]
    %v689 = vld [vmem:[#allocation7 + $0x220] sm:$0xff]
    %v690 = vld [vmem:[#allocation7 + $0x228] sm:$0xff]
    %v691 = vld [vmem:[#allocation7 + $0x230] sm:$0xff]
    %v692 = vld [vmem:[#allocation7 + $0x238] sm:$0xff]
    %v693 = vld [vmem:[#allocation7 + $0x240] sm:$0xff]
    %v694 = vld [vmem:[#allocation7 + $0x248] sm:$0xff]
    %v695 = vld [vmem:[#allocation7 + $0x250] sm:$0xff]
    %v696 = vld [vmem:[#allocation7 + $0x258] sm:$0xff]
    %v697 = vld [vmem:[#allocation7 + $0x260] sm:$0xff]
    %v698 = vld [vmem:[#allocation7 + $0x268] sm:$0xff]
    %v699 = vld [vmem:[#allocation7 + $0x270] sm:$0xff]
    %v700 = vld [vmem:[#allocation7 + $0x278] sm:$0xff]
    %v701 = vld [vmem:[#allocation7 + $0x280] sm:$0xff]
    %v702 = vld [vmem:[#allocation7 + $0x288] sm:$0xff]
    %v703 = vld [vmem:[#allocation7 + $0x290] sm:$0xff]
    %v704 = vld [vmem:[#allocation7 + $0x298] sm:$0xff]
    %v705 = vld [vmem:[#allocation7 + $0x2a0] sm:$0xff]
    %v706 = vld [vmem:[#allocation7 + $0x2a8] sm:$0xff]
    %v707 = vld [vmem:[#allocation7 + $0x2b0] sm:$0xff]
    %v708 = vld [vmem:[#allocation7 + $0x2b8] sm:$0xff]
    %v709 = vld [vmem:[#allocation7 + $0x2c0] sm:$0xff]
    %v710 = vld [vmem:[#allocation7 + $0x2c8] sm:$0xff]
    %v711 = vld [vmem:[#allocation7 + $0x2d0] sm:$0xff]
    %v712 = vld [vmem:[#allocation7 + $0x2d8] sm:$0xff]
    %v713 = vld [vmem:[#allocation7 + $0x2e0] sm:$0xff]
    %v714 = vld [vmem:[#allocation7 + $0x2e8] sm:$0xff]
    %v715 = vld [vmem:[#allocation7 + $0x2f0] sm:$0xff]
    %v716 = vld [vmem:[#allocation7 + $0x2f8] sm:$0xff]
    %v717 = vld [vmem:[#allocation7 + $0x300] sm:$0xff]
    %v718 = vld [vmem:[#allocation7 + $0x308] sm:$0xff]
    %v719 = vld [vmem:[#allocation7 + $0x310] sm:$0xff]
    %v720 = vld [vmem:[#allocation7 + $0x318] sm:$0xff]
    %v721 = vld [vmem:[#allocation7 + $0x320] sm:$0xff]
    %v722 = vld [vmem:[#allocation7 + $0x328] sm:$0xff]
    %v723 = vld [vmem:[#allocation7 + $0x330] sm:$0xff]
    %v724 = vld [vmem:[#allocation7 + $0x338] sm:$0xff]
    %v725 = vld [vmem:[#allocation7 + $0x340] sm:$0xff]
    %v726 = vld [vmem:[#allocation7 + $0x348] sm:$0xff]
    %v727 = vld [vmem:[#allocation7 + $0x350] sm:$0xff]
    %v728 = vld [vmem:[#allocation7 + $0x358] sm:$0xff]
    %v729 = vld [vmem:[#allocation7 + $0x360] sm:$0xff]
    %v730 = vld [vmem:[#allocation7 + $0x368] sm:$0xff]
    %v731 = vld [vmem:[#allocation7 + $0x370] sm:$0xff]
    %v732 = vld [vmem:[#allocation7 + $0x378] sm:$0xff]
    %v733 = vld [vmem:[#allocation7 + $0x380] sm:$0xff]
    %v734 = vld [vmem:[#allocation7 + $0x388] sm:$0xff]
    %v735 = vld [vmem:[#allocation7 + $0x390] sm:$0xff]
    %v736 = vld [vmem:[#allocation7 + $0x398] sm:$0xff]
    %v737 = vld [vmem:[#allocation7 + $0x3a0] sm:$0xff]
    %v738 = vld [vmem:[#allocation7 + $0x3a8] sm:$0xff]
    %v739 = vld [vmem:[#allocation7 + $0x3b0] sm:$0xff]
    %v740 = vld [vmem:[#allocation7 + $0x3b8] sm:$0xff]
    %v741 = vld [vmem:[#allocation7 + $0x3c0] sm:$0xff]
    %v742 = vld [vmem:[#allocation7 + $0x3c8] sm:$0xff]
    %v743 = vld [vmem:[#allocation7 + $0x3d0] sm:$0xff]
    %v744 = vld [vmem:[#allocation7 + $0x3d8] sm:$0xff]
    %v745 = vld [vmem:[#allocation7 + $0x3e0] sm:$0xff]
    %v746 = vld [vmem:[#allocation7 + $0x3e8] sm:$0xff]
    %v747 = vld [vmem:[#allocation7 + $0x3f0] sm:$0xff]
    %v748 = vld [vmem:[#allocation7 + $0x3f8] sm:$0xff]
    %v749 = vld [vmem:[#allocation7 + $0x400] sm:$0xff]
    %v750 = vld [vmem:[#allocation7 + $0x408] sm:$0xff]
    %v751 = vld [vmem:[#allocation7 + $0x410] sm:$0xff]
    %v752 = vld [vmem:[#allocation7 + $0x418] sm:$0xff]
    %v753 = vld [vmem:[#allocation7 + $0x420] sm:$0xff]
    %v754 = vld [vmem:[#allocation7 + $0x428] sm:$0xff]
    %v755 = vld [vmem:[#allocation7 + $0x430] sm:$0xff]
    %v756 = vld [vmem:[#allocation7 + $0x438] sm:$0xff]
    %v757 = vld [vmem:[#allocation7 + $0x440] sm:$0xff]
    %v758 = vld [vmem:[#allocation7 + $0x448] sm:$0xff]
    %v759 = vld [vmem:[#allocation7 + $0x450] sm:$0xff]
    %v760 = vld [vmem:[#allocation7 + $0x458] sm:$0xff]
    %v761 = vld [vmem:[#allocation7 + $0x460] sm:$0xff]
    %v762 = vld [vmem:[#allocation7 + $0x468] sm:$0xff]
    %v763 = vld [vmem:[#allocation7 + $0x470] sm:$0xff]
    %v764 = vld [vmem:[#allocation7 + $0x478] sm:$0xff]
    %v765 = vld [vmem:[#allocation7 + $0x480] sm:$0xff]
    %v766 = vld [vmem:[#allocation7 + $0x488] sm:$0xff]
    %v767 = vld [vmem:[#allocation7 + $0x490] sm:$0xff]
    %v768 = vld [vmem:[#allocation7 + $0x498] sm:$0xff]
    %v769 = vld [vmem:[#allocation7 + $0x4a0] sm:$0xff]
    %v770 = vld [vmem:[#allocation7 + $0x4a8] sm:$0xff]
    %v771 = vld [vmem:[#allocation7 + $0x4b0] sm:$0xff]
    %v772 = vld [vmem:[#allocation7 + $0x4b8] sm:$0xff]
    %v773 = vld [vmem:[#allocation7 + $0x4c0] sm:$0xff]
    %v774 = vld [vmem:[#allocation7 + $0x4c8] sm:$0xff]
    %v775 = vld [vmem:[#allocation7 + $0x4d0] sm:$0xff]
    %v776 = vld [vmem:[#allocation7 + $0x4d8] sm:$0xff]
    %v777 = vld [vmem:[#allocation7 + $0x4e0] sm:$0xff]
    %v778 = vld [vmem:[#allocation7 + $0x4e8] sm:$0xff]
    %v779 = vld [vmem:[#allocation7 + $0x4f0] sm:$0xff]
    %v780 = vld [vmem:[#allocation7 + $0x4f8] sm:$0xff]
    %v781 = vld [vmem:[#allocation7 + $0x500] sm:$0xff]
    %v782 = vld [vmem:[#allocation7 + $0x508] sm:$0xff]
    %v783 = vld [vmem:[#allocation7 + $0x510] sm:$0xff]
    %v784 = vld [vmem:[#allocation7 + $0x518] sm:$0xff]
    %v785 = vld [vmem:[#allocation7 + $0x520] sm:$0xff]
    %v786 = vld [vmem:[#allocation7 + $0x528] sm:$0xff]
    %v787 = vld [vmem:[#allocation7 + $0x530] sm:$0xff]
    %v788 = vld [vmem:[#allocation7 + $0x538] sm:$0xff]
    %v789 = vld [vmem:[#allocation7 + $0x540] sm:$0xff]
    %v790 = vld [vmem:[#allocation7 + $0x548] sm:$0xff]
    %v791 = vld [vmem:[#allocation7 + $0x550] sm:$0xff]
    %v792 = vld [vmem:[#allocation7 + $0x558] sm:$0xff]
    %v793 = vld [vmem:[#allocation7 + $0x560] sm:$0xff]
    %v794 = vld [vmem:[#allocation7 + $0x568] sm:$0xff]
    %v795 = vld [vmem:[#allocation7 + $0x570] sm:$0xff]
    %v796 = vld [vmem:[#allocation7 + $0x578] sm:$0xff]
    %v797 = vld [vmem:[#allocation7 + $0x580] sm:$0xff]
    %v798 = vld [vmem:[#allocation7 + $0x588] sm:$0xff]
    %v799 = vld [vmem:[#allocation7 + $0x590] sm:$0xff]
    %v800 = vld [vmem:[#allocation7 + $0x598] sm:$0xff]
    %v801 = vld [vmem:[#allocation7 + $0x5a0] sm:$0xff]
    %v802 = vld [vmem:[#allocation7 + $0x5a8] sm:$0xff]
    %v803 = vld [vmem:[#allocation7 + $0x5b0] sm:$0xff]
    %v804 = vld [vmem:[#allocation7 + $0x5b8] sm:$0xff]
    %v805 = vld [vmem:[#allocation7 + $0x5c0] sm:$0xff]
    %v806 = vld [vmem:[#allocation7 + $0x5c8] sm:$0xff]
    %v807 = vld [vmem:[#allocation7 + $0x5d0] sm:$0xff]
    %v808 = vld [vmem:[#allocation7 + $0x5d8] sm:$0xff]
    %v809 = vld [vmem:[#allocation7 + $0x5e0] sm:$0xff]
    %v810 = vld [vmem:[#allocation7 + $0x5e8] sm:$0xff]
    %v811 = vld [vmem:[#allocation7 + $0x5f0] sm:$0xff]
    %v812 = vld [vmem:[#allocation7 + $0x5f8] sm:$0xff]
    %v813 = vpack.c.bf16 %v617, %v617
    %v814 = vpack.c.bf16 %v618, %v618
    %v815 = vpack.c.bf16 %v619, %v619
    %v816 = vpack.c.bf16 %v620, %v620
    %v817 = vld [vmem:[%s4] sm:$0x3f]
    %v819 = vlaneseq
    %v820 = vshrl.u32 %v819, 7
    %v821 = vsub.s32 0, %v820
    %v822 = vrot.slane %v817, %v821
    %v823 = vlaneseq
    %v824 = vshrl.u32 %v823, 7
    %v825 = vsub.s32 1, %v824
    %v826 = vrot.slane %v817, %v825
    %v827 = vlaneseq
    %v828 = vshrl.u32 %v827, 7
    %v829 = vsub.s32 2, %v828
    %v830 = vrot.slane %v817, %v829
    %v831 = vlaneseq
    %v832 = vshrl.u32 %v831, 7
    %v833 = vsub.s32 3, %v832
    %v834 = vrot.slane %v817, %v833
    %v835 = vlaneseq
    %v836 = vshrl.u32 %v835, 7
    %v837 = vsub.s32 4, %v836
    %v838 = vrot.slane %v817, %v837
    %v839 = vlaneseq
    %v840 = vshrl.u32 %v839, 7
    %v841 = vsub.s32 5, %v840
    %v842 = vrot.slane %v817, %v841
    %v1041 = vunpack.c.l.b16 %v621
    %v1042 = vunpack.c.h.b16 %v621
    %v1043 = vunpack.c.l.b16 %v622
    %v1044 = vunpack.c.h.b16 %v622
    %v1045 = vunpack.c.l.b16 %v623
    %v1046 = vunpack.c.h.b16 %v623
    %v1047 = vunpack.c.l.b16 %v624
    %v1048 = vunpack.c.h.b16 %v624
    %v1049 = vunpack.c.l.b16 %v625
    %v1050 = vunpack.c.h.b16 %v625
    %v1051 = vunpack.c.l.b16 %v626
    %v1052 = vunpack.c.h.b16 %v626
    %v1053 = vunpack.c.l.b16 %v627
    %v1054 = vunpack.c.h.b16 %v627
    %v1055 = vunpack.c.l.b16 %v628
    %v1056 = vunpack.c.h.b16 %v628
    %v1057 = vunpack.c.l.b16 %v629
    %v1058 = vunpack.c.h.b16 %v629
    %v1059 = vunpack.c.l.b16 %v630
    %v1060 = vunpack.c.h.b16 %v630
    %v1061 = vunpack.c.l.b16 %v631
    %v1062 = vunpack.c.h.b16 %v631
    %v1063 = vunpack.c.l.b16 %v632
    %v1064 = vunpack.c.h.b16 %v632
    %v1065 = vunpack.c.l.b16 %v633
    %v1066 = vunpack.c.h.b16 %v633
    %v1067 = vunpack.c.l.b16 %v634
    %v1068 = vunpack.c.h.b16 %v634
    %v1069 = vunpack.c.l.b16 %v635
    %v1070 = vunpack.c.h.b16 %v635
    %v1071 = vunpack.c.l.b16 %v636
    %v1072 = vunpack.c.h.b16 %v636
    %v1073 = vunpack.c.l.b16 %v637
    %v1074 = vunpack.c.h.b16 %v637
    %v1075 = vunpack.c.l.b16 %v638
    %v1076 = vunpack.c.h.b16 %v638
    %v1077 = vunpack.c.l.b16 %v639
    %v1078 = vunpack.c.h.b16 %v639
    %v1079 = vunpack.c.l.b16 %v640
    %v1080 = vunpack.c.h.b16 %v640
    %v1081 = vunpack.c.l.b16 %v641
    %v1082 = vunpack.c.h.b16 %v641
    %v1083 = vunpack.c.l.b16 %v642
    %v1084 = vunpack.c.h.b16 %v642
    %v1085 = vunpack.c.l.b16 %v643
    %v1086 = vunpack.c.h.b16 %v643
    %v1087 = vunpack.c.l.b16 %v644
    %v1088 = vunpack.c.h.b16 %v644
    %v1089 = vunpack.c.l.b16 %v645
    %v1090 = vunpack.c.h.b16 %v645
    %v1091 = vunpack.c.l.b16 %v646
    %v1092 = vunpack.c.h.b16 %v646
    %v1093 = vunpack.c.l.b16 %v647
    %v1094 = vunpack.c.h.b16 %v647
    %v1095 = vunpack.c.l.b16 %v648
    %v1096 = vunpack.c.h.b16 %v648
    %v1097 = vunpack.c.l.b16 %v649
    %v1098 = vunpack.c.h.b16 %v649
    %v1099 = vunpack.c.l.b16 %v650
    %v1100 = vunpack.c.h.b16 %v650
    %v1101 = vunpack.c.l.b16 %v651
    %v1102 = vunpack.c.h.b16 %v651
    %v1103 = vunpack.c.l.b16 %v652
    %v1104 = vunpack.c.h.b16 %v652
    %v1105 = vunpack.c.l.b16 %v653
    %v1106 = vunpack.c.h.b16 %v653
    %v1107 = vunpack.c.l.b16 %v654
    %v1108 = vunpack.c.h.b16 %v654
    %v1109 = vunpack.c.l.b16 %v655
    %v1110 = vunpack.c.h.b16 %v655
    %v1111 = vunpack.c.l.b16 %v656
    %v1112 = vunpack.c.h.b16 %v656
    %v1113 = vunpack.c.l.b16 %v657
    %v1114 = vunpack.c.h.b16 %v657
    %v1115 = vunpack.c.l.b16 %v658
    %v1116 = vunpack.c.h.b16 %v658
    %v1117 = vunpack.c.l.b16 %v659
    %v1118 = vunpack.c.h.b16 %v659
    %v1119 = vunpack.c.l.b16 %v660
    %v1120 = vunpack.c.h.b16 %v660
    %v1121 = vunpack.c.l.b16 %v661
    %v1122 = vunpack.c.h.b16 %v661
    %v1123 = vunpack.c.l.b16 %v662
    %v1124 = vunpack.c.h.b16 %v662
    %v1125 = vunpack.c.l.b16 %v663
    %v1126 = vunpack.c.h.b16 %v663
    %v1127 = vunpack.c.l.b16 %v664
    %v1128 = vunpack.c.h.b16 %v664
    %v1129 = vunpack.c.l.b16 %v665
    %v1130 = vunpack.c.h.b16 %v665
    %v1131 = vunpack.c.l.b16 %v666
    %v1132 = vunpack.c.h.b16 %v666
    %v1133 = vunpack.c.l.b16 %v667
    %v1134 = vunpack.c.h.b16 %v667
    %v1135 = vunpack.c.l.b16 %v668
    %v1136 = vunpack.c.h.b16 %v668
    %v1137 = vunpack.c.l.b16 %v669
    %v1138 = vunpack.c.h.b16 %v669
    %v1139 = vunpack.c.l.b16 %v670
    %v1140 = vunpack.c.h.b16 %v670
    %v1141 = vunpack.c.l.b16 %v671
    %v1142 = vunpack.c.h.b16 %v671
    %v1143 = vunpack.c.l.b16 %v672
    %v1144 = vunpack.c.h.b16 %v672
    %v1145 = vunpack.c.l.b16 %v673
    %v1146 = vunpack.c.h.b16 %v673
    %v1147 = vunpack.c.l.b16 %v674
    %v1148 = vunpack.c.h.b16 %v674
    %v1149 = vunpack.c.l.b16 %v675
    %v1150 = vunpack.c.h.b16 %v675
    %v1151 = vunpack.c.l.b16 %v676
    %v1152 = vunpack.c.h.b16 %v676
    %v1153 = vunpack.c.l.b16 %v677
    %v1154 = vunpack.c.h.b16 %v677
    %v1155 = vunpack.c.l.b16 %v678
    %v1156 = vunpack.c.h.b16 %v678
    %v1157 = vunpack.c.l.b16 %v679
    %v1158 = vunpack.c.h.b16 %v679
    %v1159 = vunpack.c.l.b16 %v680
    %v1160 = vunpack.c.h.b16 %v680
    %v1161 = vunpack.c.l.b16 %v681
    %v1162 = vunpack.c.h.b16 %v681
    %v1163 = vunpack.c.l.b16 %v682
    %v1164 = vunpack.c.h.b16 %v682
    %v1165 = vunpack.c.l.b16 %v683
    %v1166 = vunpack.c.h.b16 %v683
    %v1167 = vunpack.c.l.b16 %v684
    %v1168 = vunpack.c.h.b16 %v684
    %v1169 = vunpack.c.l.b16 %v685
    %v1170 = vunpack.c.h.b16 %v685
    %v1171 = vunpack.c.l.b16 %v686
    %v1172 = vunpack.c.h.b16 %v686
    %v1173 = vunpack.c.l.b16 %v687
    %v1174 = vunpack.c.h.b16 %v687
    %v1175 = vunpack.c.l.b16 %v688
    %v1176 = vunpack.c.h.b16 %v688
    %v1177 = vunpack.c.l.b16 %v689
    %v1178 = vunpack.c.h.b16 %v689
    %v1179 = vunpack.c.l.b16 %v690
    %v1180 = vunpack.c.h.b16 %v690
    %v1181 = vunpack.c.l.b16 %v691
    %v1182 = vunpack.c.h.b16 %v691
    %v1183 = vunpack.c.l.b16 %v692
    %v1184 = vunpack.c.h.b16 %v692
    %v1185 = vunpack.c.l.b16 %v693
    %v1186 = vunpack.c.h.b16 %v693
    %v1187 = vunpack.c.l.b16 %v694
    %v1188 = vunpack.c.h.b16 %v694
    %v1189 = vunpack.c.l.b16 %v695
    %v1190 = vunpack.c.h.b16 %v695
    %v1191 = vunpack.c.l.b16 %v696
    %v1192 = vunpack.c.h.b16 %v696
    %v1193 = vunpack.c.l.b16 %v697
    %v1194 = vunpack.c.h.b16 %v697
    %v1195 = vunpack.c.l.b16 %v698
    %v1196 = vunpack.c.h.b16 %v698
    %v1197 = vunpack.c.l.b16 %v699
    %v1198 = vunpack.c.h.b16 %v699
    %v1199 = vunpack.c.l.b16 %v700
    %v1200 = vunpack.c.h.b16 %v700
    %v1201 = vunpack.c.l.b16 %v701
    %v1202 = vunpack.c.h.b16 %v701
    %v1203 = vunpack.c.l.b16 %v702
    %v1204 = vunpack.c.h.b16 %v702
    %v1205 = vunpack.c.l.b16 %v703
    %v1206 = vunpack.c.h.b16 %v703
    %v1207 = vunpack.c.l.b16 %v704
    %v1208 = vunpack.c.h.b16 %v704
    %v1209 = vunpack.c.l.b16 %v705
    %v1210 = vunpack.c.h.b16 %v705
    %v1211 = vunpack.c.l.b16 %v706
    %v1212 = vunpack.c.h.b16 %v706
    %v1213 = vunpack.c.l.b16 %v707
    %v1214 = vunpack.c.h.b16 %v707
    %v1215 = vunpack.c.l.b16 %v708
    %v1216 = vunpack.c.h.b16 %v708
    %v1217 = vunpack.c.l.b16 %v709
    %v1218 = vunpack.c.h.b16 %v709
    %v1219 = vunpack.c.l.b16 %v710
    %v1220 = vunpack.c.h.b16 %v710
    %v1221 = vunpack.c.l.b16 %v711
    %v1222 = vunpack.c.h.b16 %v711
    %v1223 = vunpack.c.l.b16 %v712
    %v1224 = vunpack.c.h.b16 %v712
    %v1225 = vunpack.c.l.b16 %v713
    %v1226 = vunpack.c.h.b16 %v713
    %v1227 = vunpack.c.l.b16 %v714
    %v1228 = vunpack.c.h.b16 %v714
    %v1229 = vunpack.c.l.b16 %v715
    %v1230 = vunpack.c.h.b16 %v715
    %v1231 = vunpack.c.l.b16 %v716
    %v1232 = vunpack.c.h.b16 %v716
    %v1233 = vunpack.c.l.b16 %v717
    %v1234 = vunpack.c.h.b16 %v717
    %v1235 = vunpack.c.l.b16 %v718
    %v1236 = vunpack.c.h.b16 %v718
    %v1237 = vunpack.c.l.b16 %v719
    %v1238 = vunpack.c.h.b16 %v719
    %v1239 = vunpack.c.l.b16 %v720
    %v1240 = vunpack.c.h.b16 %v720
    %v1241 = vunpack.c.l.b16 %v721
    %v1242 = vunpack.c.h.b16 %v721
    %v1243 = vunpack.c.l.b16 %v722
    %v1244 = vunpack.c.h.b16 %v722
    %v1245 = vunpack.c.l.b16 %v723
    %v1246 = vunpack.c.h.b16 %v723
    %v1247 = vunpack.c.l.b16 %v724
    %v1248 = vunpack.c.h.b16 %v724
    %v1249 = vunpack.c.l.b16 %v725
    %v1250 = vunpack.c.h.b16 %v725
    %v1251 = vunpack.c.l.b16 %v726
    %v1252 = vunpack.c.h.b16 %v726
    %v1253 = vunpack.c.l.b16 %v727
    %v1254 = vunpack.c.h.b16 %v727
    %v1255 = vunpack.c.l.b16 %v728
    %v1256 = vunpack.c.h.b16 %v728
    %v1257 = vunpack.c.l.b16 %v729
    %v1258 = vunpack.c.h.b16 %v729
    %v1259 = vunpack.c.l.b16 %v730
    %v1260 = vunpack.c.h.b16 %v730
    %v1261 = vunpack.c.l.b16 %v731
    %v1262 = vunpack.c.h.b16 %v731
    %v1263 = vunpack.c.l.b16 %v732
    %v1264 = vunpack.c.h.b16 %v732
    %v1265 = vunpack.c.l.b16 %v733
    %v1266 = vunpack.c.h.b16 %v733
    %v1267 = vunpack.c.l.b16 %v734
    %v1268 = vunpack.c.h.b16 %v734
    %v1269 = vunpack.c.l.b16 %v735
    %v1270 = vunpack.c.h.b16 %v735
    %v1271 = vunpack.c.l.b16 %v736
    %v1272 = vunpack.c.h.b16 %v736
    %v1273 = vunpack.c.l.b16 %v737
    %v1274 = vunpack.c.h.b16 %v737
    %v1275 = vunpack.c.l.b16 %v738
    %v1276 = vunpack.c.h.b16 %v738
    %v1277 = vunpack.c.l.b16 %v739
    %v1278 = vunpack.c.h.b16 %v739
    %v1279 = vunpack.c.l.b16 %v740
    %v1280 = vunpack.c.h.b16 %v740
    %v1281 = vunpack.c.l.b16 %v741
    %v1282 = vunpack.c.h.b16 %v741
    %v1283 = vunpack.c.l.b16 %v742
    %v1284 = vunpack.c.h.b16 %v742
    %v1285 = vunpack.c.l.b16 %v743
    %v1286 = vunpack.c.h.b16 %v743
    %v1287 = vunpack.c.l.b16 %v744
    %v1288 = vunpack.c.h.b16 %v744
    %v1289 = vunpack.c.l.b16 %v745
    %v1290 = vunpack.c.h.b16 %v745
    %v1291 = vunpack.c.l.b16 %v746
    %v1292 = vunpack.c.h.b16 %v746
    %v1293 = vunpack.c.l.b16 %v747
    %v1294 = vunpack.c.h.b16 %v747
    %v1295 = vunpack.c.l.b16 %v748
    %v1296 = vunpack.c.h.b16 %v748
    %v1297 = vunpack.c.l.b16 %v749
    %v1298 = vunpack.c.h.b16 %v749
    %v1299 = vunpack.c.l.b16 %v750
    %v1300 = vunpack.c.h.b16 %v750
    %v1301 = vunpack.c.l.b16 %v751
    %v1302 = vunpack.c.h.b16 %v751
    %v1303 = vunpack.c.l.b16 %v752
    %v1304 = vunpack.c.h.b16 %v752
    %v1305 = vunpack.c.l.b16 %v753
    %v1306 = vunpack.c.h.b16 %v753
    %v1307 = vunpack.c.l.b16 %v754
    %v1308 = vunpack.c.h.b16 %v754
    %v1309 = vunpack.c.l.b16 %v755
    %v1310 = vunpack.c.h.b16 %v755
    %v1311 = vunpack.c.l.b16 %v756
    %v1312 = vunpack.c.h.b16 %v756
    %v1313 = vunpack.c.l.b16 %v757
    %v1314 = vunpack.c.h.b16 %v757
    %v1315 = vunpack.c.l.b16 %v758
    %v1316 = vunpack.c.h.b16 %v758
    %v1317 = vunpack.c.l.b16 %v759
    %v1318 = vunpack.c.h.b16 %v759
    %v1319 = vunpack.c.l.b16 %v760
    %v1320 = vunpack.c.h.b16 %v760
    %v1321 = vunpack.c.l.b16 %v761
    %v1322 = vunpack.c.h.b16 %v761
    %v1323 = vunpack.c.l.b16 %v762
    %v1324 = vunpack.c.h.b16 %v762
    %v1325 = vunpack.c.l.b16 %v763
    %v1326 = vunpack.c.h.b16 %v763
    %v1327 = vunpack.c.l.b16 %v764
    %v1328 = vunpack.c.h.b16 %v764
    %v1329 = vunpack.c.l.b16 %v765
    %v1330 = vunpack.c.h.b16 %v765
    %v1331 = vunpack.c.l.b16 %v766
    %v1332 = vunpack.c.h.b16 %v766
    %v1333 = vunpack.c.l.b16 %v767
    %v1334 = vunpack.c.h.b16 %v767
    %v1335 = vunpack.c.l.b16 %v768
    %v1336 = vunpack.c.h.b16 %v768
    %v1337 = vunpack.c.l.b16 %v769
    %v1338 = vunpack.c.h.b16 %v769
    %v1339 = vunpack.c.l.b16 %v770
    %v1340 = vunpack.c.h.b16 %v770
    %v1341 = vunpack.c.l.b16 %v771
    %v1342 = vunpack.c.h.b16 %v771
    %v1343 = vunpack.c.l.b16 %v772
    %v1344 = vunpack.c.h.b16 %v772
    %v1345 = vunpack.c.l.b16 %v773
    %v1346 = vunpack.c.h.b16 %v773
    %v1347 = vunpack.c.l.b16 %v774
    %v1348 = vunpack.c.h.b16 %v774
    %v1349 = vunpack.c.l.b16 %v775
    %v1350 = vunpack.c.h.b16 %v775
    %v1351 = vunpack.c.l.b16 %v776
    %v1352 = vunpack.c.h.b16 %v776
    %v1353 = vunpack.c.l.b16 %v777
    %v1354 = vunpack.c.h.b16 %v777
    %v1355 = vunpack.c.l.b16 %v778
    %v1356 = vunpack.c.h.b16 %v778
    %v1357 = vunpack.c.l.b16 %v779
    %v1358 = vunpack.c.h.b16 %v779
    %v1359 = vunpack.c.l.b16 %v780
    %v1360 = vunpack.c.h.b16 %v780
    %v1361 = vunpack.c.l.b16 %v781
    %v1362 = vunpack.c.h.b16 %v781
    %v1363 = vunpack.c.l.b16 %v782
    %v1364 = vunpack.c.h.b16 %v782
    %v1365 = vunpack.c.l.b16 %v783
    %v1366 = vunpack.c.h.b16 %v783
    %v1367 = vunpack.c.l.b16 %v784
    %v1368 = vunpack.c.h.b16 %v784
    %v1369 = vunpack.c.l.b16 %v785
    %v1370 = vunpack.c.h.b16 %v785
    %v1371 = vunpack.c.l.b16 %v786
    %v1372 = vunpack.c.h.b16 %v786
    %v1373 = vunpack.c.l.b16 %v787
    %v1374 = vunpack.c.h.b16 %v787
    %v1375 = vunpack.c.l.b16 %v788
    %v1376 = vunpack.c.h.b16 %v788
    %v1377 = vunpack.c.l.b16 %v789
    %v1378 = vunpack.c.h.b16 %v789
    %v1379 = vunpack.c.l.b16 %v790
    %v1380 = vunpack.c.h.b16 %v790
    %v1381 = vunpack.c.l.b16 %v791
    %v1382 = vunpack.c.h.b16 %v791
    %v1383 = vunpack.c.l.b16 %v792
    %v1384 = vunpack.c.h.b16 %v792
    %v1385 = vunpack.c.l.b16 %v793
    %v1386 = vunpack.c.h.b16 %v793
    %v1387 = vunpack.c.l.b16 %v794
    %v1388 = vunpack.c.h.b16 %v794
    %v1389 = vunpack.c.l.b16 %v795
    %v1390 = vunpack.c.h.b16 %v795
    %v1391 = vunpack.c.l.b16 %v796
    %v1392 = vunpack.c.h.b16 %v796
    %v1393 = vunpack.c.l.b16 %v797
    %v1394 = vunpack.c.h.b16 %v797
    %v1395 = vunpack.c.l.b16 %v798
    %v1396 = vunpack.c.h.b16 %v798
    %v1397 = vunpack.c.l.b16 %v799
    %v1398 = vunpack.c.h.b16 %v799
    %v1399 = vunpack.c.l.b16 %v800
    %v1400 = vunpack.c.h.b16 %v800
    %v1401 = vunpack.c.l.b16 %v801
    %v1402 = vunpack.c.h.b16 %v801
    %v1403 = vunpack.c.l.b16 %v802
    %v1404 = vunpack.c.h.b16 %v802
    %v1405 = vunpack.c.l.b16 %v803
    %v1406 = vunpack.c.h.b16 %v803
    %v1407 = vunpack.c.l.b16 %v804
    %v1408 = vunpack.c.h.b16 %v804
    %v1409 = vunpack.c.l.b16 %v805
    %v1410 = vunpack.c.h.b16 %v805
    %v1411 = vunpack.c.l.b16 %v806
    %v1412 = vunpack.c.h.b16 %v806
    %v1413 = vunpack.c.l.b16 %v807
    %v1414 = vunpack.c.h.b16 %v807
    %v1415 = vunpack.c.l.b16 %v808
    %v1416 = vunpack.c.h.b16 %v808
    %v1417 = vunpack.c.l.b16 %v809
    %v1418 = vunpack.c.h.b16 %v809
    %v1419 = vunpack.c.l.b16 %v810
    %v1420 = vunpack.c.h.b16 %v810
    %v1421 = vunpack.c.l.b16 %v811
    %v1422 = vunpack.c.h.b16 %v811
    %v1423 = vunpack.c.l.b16 %v812
    %v1424 = vunpack.c.h.b16 %v812
    %v1425 = vpack.c.b16 %v1047, %v1041
    %v1426 = vpack.c.b16 %v1048, %v1042
    %v1427 = vpack.c.b16 %v1049, %v1043
    %v1428 = vpack.c.b16 %v1050, %v1044
    %v1429 = vpack.c.b16 %v1051, %v1045
    %v1430 = vpack.c.b16 %v1052, %v1046
    %v1431 = vpack.c.b16 %v1059, %v1053
    %v1432 = vpack.c.b16 %v1060, %v1054
    %v1433 = vpack.c.b16 %v1061, %v1055
    %v1434 = vpack.c.b16 %v1062, %v1056
    %v1435 = vpack.c.b16 %v1063, %v1057
    %v1436 = vpack.c.b16 %v1064, %v1058
    %v1437 = vpack.c.b16 %v1071, %v1065
    %v1438 = vpack.c.b16 %v1072, %v1066
    %v1439 = vpack.c.b16 %v1073, %v1067
    %v1440 = vpack.c.b16 %v1074, %v1068
    %v1441 = vpack.c.b16 %v1075, %v1069
    %v1442 = vpack.c.b16 %v1076, %v1070
    %v1443 = vpack.c.b16 %v1083, %v1077
    %v1444 = vpack.c.b16 %v1084, %v1078
    %v1445 = vpack.c.b16 %v1085, %v1079
    %v1446 = vpack.c.b16 %v1086, %v1080
    %v1447 = vpack.c.b16 %v1087, %v1081
    %v1448 = vpack.c.b16 %v1088, %v1082
    %v1449 = vpack.c.b16 %v1095, %v1089
    %v1450 = vpack.c.b16 %v1096, %v1090
    %v1451 = vpack.c.b16 %v1097, %v1091
    %v1452 = vpack.c.b16 %v1098, %v1092
    %v1453 = vpack.c.b16 %v1099, %v1093
    %v1454 = vpack.c.b16 %v1100, %v1094
    %v1455 = vpack.c.b16 %v1107, %v1101
    %v1456 = vpack.c.b16 %v1108, %v1102
    %v1457 = vpack.c.b16 %v1109, %v1103
    %v1458 = vpack.c.b16 %v1110, %v1104
    %v1459 = vpack.c.b16 %v1111, %v1105
    %v1460 = vpack.c.b16 %v1112, %v1106
    %v1461 = vpack.c.b16 %v1119, %v1113
    %v1462 = vpack.c.b16 %v1120, %v1114
    %v1463 = vpack.c.b16 %v1121, %v1115
    %v1464 = vpack.c.b16 %v1122, %v1116
    %v1465 = vpack.c.b16 %v1123, %v1117
    %v1466 = vpack.c.b16 %v1124, %v1118
    %v1467 = vpack.c.b16 %v1131, %v1125
    %v1468 = vpack.c.b16 %v1132, %v1126
    %v1469 = vpack.c.b16 %v1133, %v1127
    %v1470 = vpack.c.b16 %v1134, %v1128
    %v1471 = vpack.c.b16 %v1135, %v1129
    %v1472 = vpack.c.b16 %v1136, %v1130
    %v1473 = vpack.c.b16 %v1143, %v1137
    %v1474 = vpack.c.b16 %v1144, %v1138
    %v1475 = vpack.c.b16 %v1145, %v1139
    %v1476 = vpack.c.b16 %v1146, %v1140
    %v1477 = vpack.c.b16 %v1147, %v1141
    %v1478 = vpack.c.b16 %v1148, %v1142
    %v1479 = vpack.c.b16 %v1155, %v1149
    %v1480 = vpack.c.b16 %v1156, %v1150
    %v1481 = vpack.c.b16 %v1157, %v1151
    %v1482 = vpack.c.b16 %v1158, %v1152
    %v1483 = vpack.c.b16 %v1159, %v1153
    %v1484 = vpack.c.b16 %v1160, %v1154
    %v1485 = vpack.c.b16 %v1167, %v1161
    %v1486 = vpack.c.b16 %v1168, %v1162
    %v1487 = vpack.c.b16 %v1169, %v1163
    %v1488 = vpack.c.b16 %v1170, %v1164
    %v1489 = vpack.c.b16 %v1171, %v1165
    %v1490 = vpack.c.b16 %v1172, %v1166
    %v1491 = vpack.c.b16 %v1179, %v1173
    %v1492 = vpack.c.b16 %v1180, %v1174
    %v1493 = vpack.c.b16 %v1181, %v1175
    %v1494 = vpack.c.b16 %v1182, %v1176
    %v1495 = vpack.c.b16 %v1183, %v1177
    %v1496 = vpack.c.b16 %v1184, %v1178
    %v1497 = vpack.c.b16 %v1191, %v1185
    %v1498 = vpack.c.b16 %v1192, %v1186
    %v1499 = vpack.c.b16 %v1193, %v1187
    %v1500 = vpack.c.b16 %v1194, %v1188
    %v1501 = vpack.c.b16 %v1195, %v1189
    %v1502 = vpack.c.b16 %v1196, %v1190
    %v1503 = vpack.c.b16 %v1203, %v1197
    %v1504 = vpack.c.b16 %v1204, %v1198
    %v1505 = vpack.c.b16 %v1205, %v1199
    %v1506 = vpack.c.b16 %v1206, %v1200
    %v1507 = vpack.c.b16 %v1207, %v1201
    %v1508 = vpack.c.b16 %v1208, %v1202
    %v1509 = vpack.c.b16 %v1215, %v1209
    %v1510 = vpack.c.b16 %v1216, %v1210
    %v1511 = vpack.c.b16 %v1217, %v1211
    %v1512 = vpack.c.b16 %v1218, %v1212
    %v1513 = vpack.c.b16 %v1219, %v1213
    %v1514 = vpack.c.b16 %v1220, %v1214
    %v1515 = vpack.c.b16 %v1227, %v1221
    %v1516 = vpack.c.b16 %v1228, %v1222
    %v1517 = vpack.c.b16 %v1229, %v1223
    %v1518 = vpack.c.b16 %v1230, %v1224
    %v1519 = vpack.c.b16 %v1231, %v1225
    %v1520 = vpack.c.b16 %v1232, %v1226
    %v1521 = vpack.c.b16 %v1239, %v1233
    %v1522 = vpack.c.b16 %v1240, %v1234
    %v1523 = vpack.c.b16 %v1241, %v1235
    %v1524 = vpack.c.b16 %v1242, %v1236
    %v1525 = vpack.c.b16 %v1243, %v1237
    %v1526 = vpack.c.b16 %v1244, %v1238
    %v1527 = vpack.c.b16 %v1251, %v1245
    %v1528 = vpack.c.b16 %v1252, %v1246
    %v1529 = vpack.c.b16 %v1253, %v1247
    %v1530 = vpack.c.b16 %v1254, %v1248
    %v1531 = vpack.c.b16 %v1255, %v1249
    %v1532 = vpack.c.b16 %v1256, %v1250
    %v1533 = vpack.c.b16 %v1263, %v1257
    %v1534 = vpack.c.b16 %v1264, %v1258
    %v1535 = vpack.c.b16 %v1265, %v1259
    %v1536 = vpack.c.b16 %v1266, %v1260
    %v1537 = vpack.c.b16 %v1267, %v1261
    %v1538 = vpack.c.b16 %v1268, %v1262
    %v1539 = vpack.c.b16 %v1275, %v1269
    %v1540 = vpack.c.b16 %v1276, %v1270
    %v1541 = vpack.c.b16 %v1277, %v1271
    %v1542 = vpack.c.b16 %v1278, %v1272
    %v1543 = vpack.c.b16 %v1279, %v1273
    %v1544 = vpack.c.b16 %v1280, %v1274
    %v1545 = vpack.c.b16 %v1287, %v1281
    %v1546 = vpack.c.b16 %v1288, %v1282
    %v1547 = vpack.c.b16 %v1289, %v1283
    %v1548 = vpack.c.b16 %v1290, %v1284
    %v1549 = vpack.c.b16 %v1291, %v1285
    %v1550 = vpack.c.b16 %v1292, %v1286
    %v1551 = vpack.c.b16 %v1299, %v1293
    %v1552 = vpack.c.b16 %v1300, %v1294
    %v1553 = vpack.c.b16 %v1301, %v1295
    %v1554 = vpack.c.b16 %v1302, %v1296
    %v1555 = vpack.c.b16 %v1303, %v1297
    %v1556 = vpack.c.b16 %v1304, %v1298
    %v1557 = vpack.c.b16 %v1311, %v1305
    %v1558 = vpack.c.b16 %v1312, %v1306
    %v1559 = vpack.c.b16 %v1313, %v1307
    %v1560 = vpack.c.b16 %v1314, %v1308
    %v1561 = vpack.c.b16 %v1315, %v1309
    %v1562 = vpack.c.b16 %v1316, %v1310
    %v1563 = vpack.c.b16 %v1323, %v1317
    %v1564 = vpack.c.b16 %v1324, %v1318
    %v1565 = vpack.c.b16 %v1325, %v1319
    %v1566 = vpack.c.b16 %v1326, %v1320
    %v1567 = vpack.c.b16 %v1327, %v1321
    %v1568 = vpack.c.b16 %v1328, %v1322
    %v1569 = vpack.c.b16 %v1335, %v1329
    %v1570 = vpack.c.b16 %v1336, %v1330
    %v1571 = vpack.c.b16 %v1337, %v1331
    %v1572 = vpack.c.b16 %v1338, %v1332
    %v1573 = vpack.c.b16 %v1339, %v1333
    %v1574 = vpack.c.b16 %v1340, %v1334
    %v1575 = vpack.c.b16 %v1347, %v1341
    %v1576 = vpack.c.b16 %v1348, %v1342
    %v1577 = vpack.c.b16 %v1349, %v1343
    %v1578 = vpack.c.b16 %v1350, %v1344
    %v1579 = vpack.c.b16 %v1351, %v1345
    %v1580 = vpack.c.b16 %v1352, %v1346
    %v1581 = vpack.c.b16 %v1359, %v1353
    %v1582 = vpack.c.b16 %v1360, %v1354
    %v1583 = vpack.c.b16 %v1361, %v1355
    %v1584 = vpack.c.b16 %v1362, %v1356
    %v1585 = vpack.c.b16 %v1363, %v1357
    %v1586 = vpack.c.b16 %v1364, %v1358
    %v1587 = vpack.c.b16 %v1371, %v1365
    %v1588 = vpack.c.b16 %v1372, %v1366
    %v1589 = vpack.c.b16 %v1373, %v1367
    %v1590 = vpack.c.b16 %v1374, %v1368
    %v1591 = vpack.c.b16 %v1375, %v1369
    %v1592 = vpack.c.b16 %v1376, %v1370
    %v1593 = vpack.c.b16 %v1383, %v1377
    %v1594 = vpack.c.b16 %v1384, %v1378
    %v1595 = vpack.c.b16 %v1385, %v1379
    %v1596 = vpack.c.b16 %v1386, %v1380
    %v1597 = vpack.c.b16 %v1387, %v1381
    %v1598 = vpack.c.b16 %v1388, %v1382
    %v1599 = vpack.c.b16 %v1395, %v1389
    %v1600 = vpack.c.b16 %v1396, %v1390
    %v1601 = vpack.c.b16 %v1397, %v1391
    %v1602 = vpack.c.b16 %v1398, %v1392
    %v1603 = vpack.c.b16 %v1399, %v1393
    %v1604 = vpack.c.b16 %v1400, %v1394
    %v1605 = vpack.c.b16 %v1407, %v1401
    %v1606 = vpack.c.b16 %v1408, %v1402
    %v1607 = vpack.c.b16 %v1409, %v1403
    %v1608 = vpack.c.b16 %v1410, %v1404
    %v1609 = vpack.c.b16 %v1411, %v1405
    %v1610 = vpack.c.b16 %v1412, %v1406
    %v1611 = vpack.c.b16 %v1419, %v1413
    %v1612 = vpack.c.b16 %v1420, %v1414
    %v1613 = vpack.c.b16 %v1421, %v1415
    %v1614 = vpack.c.b16 %v1422, %v1416
    %v1615 = vpack.c.b16 %v1423, %v1417
    %v1616 = vpack.c.b16 %v1424, %v1418
    %1809 = vmatprep.subr.bf16.mxu0 %v1426
    %1810 = vmatpush1.bf16.msra.mxu0 %v1425
    %1811 = vmatprep.subr.bf16.mxu0 %v1432
    %1812 = vmatpush1.bf16.msra.mxu0 %v1431
    %1813 = vmatprep.subr.bf16.mxu0 %v1438
    %1814 = vmatpush1.bf16.msra.mxu0 %v1437
    %1815 = vmatprep.subr.bf16.mxu0 %v1444
    %1816 = vmatpush1.bf16.msra.mxu0 %v1443
    %1817 = vmatprep.subr.bf16.mxu0 %v1450
    %1818 = vmatpush1.bf16.msra.mxu0 %v1449
    %1819 = vmatprep.subr.bf16.mxu0 %v1456
    %1820 = vmatpush1.bf16.msra.mxu0 %v1455
    %1821 = vmatprep.subr.bf16.mxu0 %v1462
    %1822 = vmatpush1.bf16.msra.mxu0 %v1461
    %1823 = vmatprep.subr.bf16.mxu0 %v1468
    %1824 = vmatpush1.bf16.msra.mxu0 %v1467
    %1825 = vmatprep.subr.bf16.mxu0 %v1474
    %1826 = vmatpush1.bf16.msra.mxu0 %v1473
    %1827 = vmatprep.subr.bf16.mxu0 %v1480
    %1828 = vmatpush1.bf16.msra.mxu0 %v1479
    %1829 = vmatprep.subr.bf16.mxu0 %v1486
    %1830 = vmatpush1.bf16.msra.mxu0 %v1485
    %1831 = vmatprep.subr.bf16.mxu0 %v1492
    %1832 = vmatpush1.bf16.msra.mxu0 %v1491
    %1833 = vmatprep.subr.bf16.mxu0 %v1498
    %1834 = vmatpush1.bf16.msra.mxu0 %v1497
    %1835 = vmatprep.subr.bf16.mxu0 %v1504
    %1836 = vmatpush1.bf16.msra.mxu0 %v1503
    %1837 = vmatprep.subr.bf16.mxu0 %v1510
    %1838 = vmatpush1.bf16.msra.mxu0 %v1509
    %1839 = vmatprep.subr.bf16.mxu0 %v1516
    %1840 = vmatpush1.bf16.msra.mxu0 %v1515
    %1841 = vmatprep.mubr.bf16.mxu0 %v814
    %1842 = vmatmul.mubr.bf16.gmra.mrb[0].mxu0 %v813
    %v1843 = vpop.f32.mrb[0].mxu0
    %v1844 = vadd.f32 %v822, %v1843
    %v1845 = vpop.f32.mrb[0].mxu0
    %v1846 = vadd.f32 %v826, %v1845
    %v1847 = vpop.f32.mrb[0].mxu0
    %v1848 = vpop.f32.mrb[0].mxu0
    %1849 = vdwg.mxu0
    %1850 = vmatprep.subr.bf16.mxu0 %v1522
    %1851 = vmatpush1.bf16.msra.mxu0 %v1521
    %1852 = vmatprep.subr.bf16.mxu0 %v1528
    %1853 = vmatpush1.bf16.msra.mxu0 %v1527
    %1854 = vmatprep.subr.bf16.mxu0 %v1534
    %1855 = vmatpush1.bf16.msra.mxu0 %v1533
    %1856 = vmatprep.subr.bf16.mxu0 %v1540
    %1857 = vmatpush1.bf16.msra.mxu0 %v1539
    %1858 = vmatprep.subr.bf16.mxu0 %v1546
    %1859 = vmatpush1.bf16.msra.mxu0 %v1545
    %1860 = vmatprep.subr.bf16.mxu0 %v1552
    %1861 = vmatpush1.bf16.msra.mxu0 %v1551
    %1862 = vmatprep.subr.bf16.mxu0 %v1558
    %1863 = vmatpush1.bf16.msra.mxu0 %v1557
    %1864 = vmatprep.subr.bf16.mxu0 %v1564
    %1865 = vmatpush1.bf16.msra.mxu0 %v1563
    %1866 = vmatprep.subr.bf16.mxu0 %v1570
    %1867 = vmatpush1.bf16.msra.mxu0 %v1569
    %1868 = vmatprep.subr.bf16.mxu0 %v1576
    %1869 = vmatpush1.bf16.msra.mxu0 %v1575
    %1870 = vmatprep.subr.bf16.mxu0 %v1582
    %1871 = vmatpush1.bf16.msra.mxu0 %v1581
    %1872 = vmatprep.subr.bf16.mxu0 %v1588
    %1873 = vmatpush1.bf16.msra.mxu0 %v1587
    %1874 = vmatprep.subr.bf16.mxu0 %v1594
    %1875 = vmatpush1.bf16.msra.mxu0 %v1593
    %1876 = vmatprep.subr.bf16.mxu0 %v1600
    %1877 = vmatpush1.bf16.msra.mxu0 %v1599
    %1878 = vmatprep.subr.bf16.mxu0 %v1606
    %1879 = vmatpush1.bf16.msra.mxu0 %v1605
    %1880 = vmatprep.subr.bf16.mxu0 %v1612
    %1881 = vmatpush1.bf16.msra.mxu0 %v1611
    %1882 = vmatprep.mubr.bf16.mxu0 %v816
    %1883 = vmatmul.mubr.bf16.gmra.mrb[0].mxu0 %v815
    %v1884 = vpop.f32.mrb[0].mxu0
    %v1885 = vadd.f32 %v1844, %v1884
    %v1886 = vpop.f32.mrb[0].mxu0
    %v1887 = vadd.f32 %v1846, %v1886
    %v1888 = vpop.f32.mrb[0].mxu0
    %v1889 = vpop.f32.mrb[0].mxu0
    %1890 = vdwg.mxu0
    %1891 = vmatprep.subr.bf16.mxu0 %v1428
    %1892 = vmatpush1.bf16.msra.mxu0 %v1427
    %1893 = vmatprep.subr.bf16.mxu0 %v1434
    %1894 = vmatpush1.bf16.msra.mxu0 %v1433
    %1895 = vmatprep.subr.bf16.mxu0 %v1440
    %1896 = vmatpush1.bf16.msra.mxu0 %v1439
    %1897 = vmatprep.subr.bf16.mxu0 %v1446
    %1898 = vmatpush1.bf16.msra.mxu0 %v1445
    %1899 = vmatprep.subr.bf16.mxu0 %v1452
    %1900 = vmatpush1.bf16.msra.mxu0 %v1451
    %1901 = vmatprep.subr.bf16.mxu0 %v1458
    %1902 = vmatpush1.bf16.msra.mxu0 %v1457
    %1903 = vmatprep.subr.bf16.mxu0 %v1464
    %1904 = vmatpush1.bf16.msra.mxu0 %v1463
    %1905 = vmatprep.subr.bf16.mxu0 %v1470
    %1906 = vmatpush1.bf16.msra.mxu0 %v1469
    %1907 = vmatprep.subr.bf16.mxu0 %v1476
    %1908 = vmatpush1.bf16.msra.mxu0 %v1475
    %1909 = vmatprep.subr.bf16.mxu0 %v1482
    %1910 = vmatpush1.bf16.msra.mxu0 %v1481
    %1911 = vmatprep.subr.bf16.mxu0 %v1488
    %1912 = vmatpush1.bf16.msra.mxu0 %v1487
    %1913 = vmatprep.subr.bf16.mxu0 %v1494
    %1914 = vmatpush1.bf16.msra.mxu0 %v1493
    %1915 = vmatprep.subr.bf16.mxu0 %v1500
    %1916 = vmatpush1.bf16.msra.mxu0 %v1499
    %1917 = vmatprep.subr.bf16.mxu0 %v1506
    %1918 = vmatpush1.bf16.msra.mxu0 %v1505
    %1919 = vmatprep.subr.bf16.mxu0 %v1512
    %1920 = vmatpush1.bf16.msra.mxu0 %v1511
    %1921 = vmatprep.subr.bf16.mxu0 %v1518
    %1922 = vmatpush1.bf16.msra.mxu0 %v1517
    %1923 = vmatprep.mubr.bf16.mxu0 %v814
    %1924 = vmatmul.mubr.bf16.gmra.mrb[0].mxu0 %v813
    %v1925 = vpop.f32.mrb[0].mxu0
    %v1926 = vadd.f32 %v830, %v1925
    %v1927 = vpop.f32.mrb[0].mxu0
    %v1928 = vadd.f32 %v834, %v1927
    %v1929 = vpop.f32.mrb[0].mxu0
    %v1930 = vpop.f32.mrb[0].mxu0
    %1931 = vdwg.mxu0
    %1932 = vmatprep.subr.bf16.mxu0 %v1524
    %1933 = vmatpush1.bf16.msra.mxu0 %v1523
    %1934 = vmatprep.subr.bf16.mxu0 %v1530
    %1935 = vmatpush1.bf16.msra.mxu0 %v1529
    %1936 = vmatprep.subr.bf16.mxu0 %v1536
    %1937 = vmatpush1.bf16.msra.mxu0 %v1535
    %1938 = vmatprep.subr.bf16.mxu0 %v1542
    %1939 = vmatpush1.bf16.msra.mxu0 %v1541
    %1940 = vmatprep.subr.bf16.mxu0 %v1548
    %1941 = vmatpush1.bf16.msra.mxu0 %v1547
    %1942 = vmatprep.subr.bf16.mxu0 %v1554
    %1943 = vmatpush1.bf16.msra.mxu0 %v1553
    %1944 = vmatprep.subr.bf16.mxu0 %v1560
    %1945 = vmatpush1.bf16.msra.mxu0 %v1559
    %1946 = vmatprep.subr.bf16.mxu0 %v1566
    %1947 = vmatpush1.bf16.msra.mxu0 %v1565
    %1948 = vmatprep.subr.bf16.mxu0 %v1572
    %1949 = vmatpush1.bf16.msra.mxu0 %v1571
    %1950 = vmatprep.subr.bf16.mxu0 %v1578
    %1951 = vmatpush1.bf16.msra.mxu0 %v1577
    %1952 = vmatprep.subr.bf16.mxu0 %v1584
    %1953 = vmatpush1.bf16.msra.mxu0 %v1583
    %1954 = vmatprep.subr.bf16.mxu0 %v1590
    %1955 = vmatpush1.bf16.msra.mxu0 %v1589
    %1956 = vmatprep.subr.bf16.mxu0 %v1596
    %1957 = vmatpush1.bf16.msra.mxu0 %v1595
    %1958 = vmatprep.subr.bf16.mxu0 %v1602
    %1959 = vmatpush1.bf16.msra.mxu0 %v1601
    %1960 = vmatprep.subr.bf16.mxu0 %v1608
    %1961 = vmatpush1.bf16.msra.mxu0 %v1607
    %1962 = vmatprep.subr.bf16.mxu0 %v1614
    %1963 = vmatpush1.bf16.msra.mxu0 %v1613
    %1964 = vmatprep.mubr.bf16.mxu0 %v816
    %1965 = vmatmul.mubr.bf16.gmra.mrb[0].mxu0 %v815
    %v1966 = vpop.f32.mrb[0].mxu0
    %v1967 = vadd.f32 %v1926, %v1966
    %v1968 = vpop.f32.mrb[0].mxu0
    %v1969 = vadd.f32 %v1928, %v1968
    %v1970 = vpop.f32.mrb[0].mxu0
    %v1971 = vpop.f32.mrb[0].mxu0
    %1972 = vdwg.mxu0
    %1973 = vmatprep.subr.bf16.mxu0 %v1430
    %1974 = vmatpush1.bf16.msra.mxu0 %v1429
    %1975 = vmatprep.subr.bf16.mxu0 %v1436
    %1976 = vmatpush1.bf16.msra.mxu0 %v1435
    %1977 = vmatprep.subr.bf16.mxu0 %v1442
    %1978 = vmatpush1.bf16.msra.mxu0 %v1441
    %1979 = vmatprep.subr.bf16.mxu0 %v1448
    %1980 = vmatpush1.bf16.msra.mxu0 %v1447
    %1981 = vmatprep.subr.bf16.mxu0 %v1454
    %1982 = vmatpush1.bf16.msra.mxu0 %v1453
    %1983 = vmatprep.subr.bf16.mxu0 %v1460
    %1984 = vmatpush1.bf16.msra.mxu0 %v1459
    %1985 = vmatprep.subr.bf16.mxu0 %v1466
    %1986 = vmatpush1.bf16.msra.mxu0 %v1465
    %1987 = vmatprep.subr.bf16.mxu0 %v1472
    %1988 = vmatpush1.bf16.msra.mxu0 %v1471
    %1989 = vmatprep.subr.bf16.mxu0 %v1478
    %1990 = vmatpush1.bf16.msra.mxu0 %v1477
    %1991 = vmatprep.subr.bf16.mxu0 %v1484
    %1992 = vmatpush1.bf16.msra.mxu0 %v1483
    %1993 = vmatprep.subr.bf16.mxu0 %v1490
    %1994 = vmatpush1.bf16.msra.mxu0 %v1489
    %1995 = vmatprep.subr.bf16.mxu0 %v1496
    %1996 = vmatpush1.bf16.msra.mxu0 %v1495
    %1997 = vmatprep.subr.bf16.mxu0 %v1502
    %1998 = vmatpush1.bf16.msra.mxu0 %v1501
    %1999 = vmatprep.subr.bf16.mxu0 %v1508
    %2000 = vmatpush1.bf16.msra.mxu0 %v1507
    %2001 = vmatprep.subr.bf16.mxu0 %v1514
    %2002 = vmatpush1.bf16.msra.mxu0 %v1513
    %2003 = vmatprep.subr.bf16.mxu0 %v1520
    %2004 = vmatpush1.bf16.msra.mxu0 %v1519
    %2005 = vmatprep.mubr.bf16.mxu0 %v814
    %2006 = vmatmul.mubr.bf16.gmra.mrb[0].mxu0 %v813
    %v2007 = vpop.f32.mrb[0].mxu0
    %v2008 = vadd.f32 %v838, %v2007
    %v2009 = vpop.f32.mrb[0].mxu0
    %v2010 = vadd.f32 %v842, %v2009
    %v2011 = vpop.f32.mrb[0].mxu0
    %v2012 = vpop.f32.mrb[0].mxu0
    %2013 = vdwg.mxu0
    %2014 = vmatprep.subr.bf16.mxu0 %v1526
    %2015 = vmatpush1.bf16.msra.mxu0 %v1525
    %2016 = vmatprep.subr.bf16.mxu0 %v1532
    %2017 = vmatpush1.bf16.msra.mxu0 %v1531
    %2018 = vmatprep.subr.bf16.mxu0 %v1538
    %2019 = vmatpush1.bf16.msra.mxu0 %v1537
    %2020 = vmatprep.subr.bf16.mxu0 %v1544
    %2021 = vmatpush1.bf16.msra.mxu0 %v1543
    %2022 = vmatprep.subr.bf16.mxu0 %v1550
    %2023 = vmatpush1.bf16.msra.mxu0 %v1549
    %2024 = vmatprep.subr.bf16.mxu0 %v1556
    %2025 = vmatpush1.bf16.msra.mxu0 %v1555
    %2026 = vmatprep.subr.bf16.mxu0 %v1562
    %2027 = vmatpush1.bf16.msra.mxu0 %v1561
    %2028 = vmatprep.subr.bf16.mxu0 %v1568
    %2029 = vmatpush1.bf16.msra.mxu0 %v1567
    %2030 = vmatprep.subr.bf16.mxu0 %v1574
    %2031 = vmatpush1.bf16.msra.mxu0 %v1573
    %2032 = vmatprep.subr.bf16.mxu0 %v1580
    %2033 = vmatpush1.bf16.msra.mxu0 %v1579
    %2034 = vmatprep.subr.bf16.mxu0 %v1586
    %2035 = vmatpush1.bf16.msra.mxu0 %v1585
    %2036 = vmatprep.subr.bf16.mxu0 %v1592
    %2037 = vmatpush1.bf16.msra.mxu0 %v1591
    %2038 = vmatprep.subr.bf16.mxu0 %v1598
    %2039 = vmatpush1.bf16.msra.mxu0 %v1597
    %2040 = vmatprep.subr.bf16.mxu0 %v1604
    %2041 = vmatpush1.bf16.msra.mxu0 %v1603
    %2042 = vmatprep.subr.bf16.mxu0 %v1610
    %2043 = vmatpush1.bf16.msra.mxu0 %v1609
    %2044 = vmatprep.subr.bf16.mxu0 %v1616
    %2045 = vmatpush1.bf16.msra.mxu0 %v1615
    %2046 = vmatprep.mubr.bf16.mxu0 %v816
    %2047 = vmatmul.mubr.bf16.gmra.mrb[0].mxu0 %v815
    %v2048 = vpop.f32.mrb[0].mxu0
    %v2049 = vadd.f32 %v2008, %v2048
    %v2050 = vpop.f32.mrb[0].mxu0
    %v2051 = vadd.f32 %v2010, %v2050
    %v2052 = vpop.f32.mrb[0].mxu0
    %v2053 = vpop.f32.mrb[0].mxu0
    %2054 = vdwg.mxu0
    %v2055 = vmax.f32 %v1885, 0.0
    %v2056 = vmax.f32 %v1887, 0.0
    %v2057 = vmax.f32 %v1967, 0.0
    %v2058 = vmax.f32 %v1969, 0.0
    %v2059 = vmax.f32 %v2049, 0.0
    %v2060 = vmax.f32 %v2051, 0.0
    %v2061 = vld [vmem:[#allocation8] sm:$0xf]
    %v2062 = vld [vmem:[#allocation8 + $0x4] sm:$0xf]
    %v2063 = vld [vmem:[#allocation8 + $0x8] sm:$0xf]
    %v2064 = vld [vmem:[#allocation8 + $0xc] sm:$0xf]
    %v2065 = vld [vmem:[#allocation8 + $0x10] sm:$0xf]
    %v2066 = vld [vmem:[#allocation8 + $0x14] sm:$0xf]
    %v2067 = vld [vmem:[#allocation8 + $0x18] sm:$0xf]
    %v2068 = vld [vmem:[#allocation8 + $0x1c] sm:$0xf]
    %v2069 = vld [vmem:[#allocation8 + $0x20] sm:$0xf]
    %v2070 = vld [vmem:[#allocation8 + $0x24] sm:$0xf]
    %v2071 = vld [vmem:[#allocation8 + $0x28] sm:$0xf]
    %v2072 = vld [vmem:[#allocation8 + $0x2c] sm:$0xf]
    %v2073 = vld [vmem:[#allocation8 + $0x30] sm:$0xf]
    %v2074 = vld [vmem:[#allocation8 + $0x34] sm:$0xf]
    %v2075 = vld [vmem:[#allocation8 + $0x38] sm:$0xf]
    %v2076 = vld [vmem:[#allocation8 + $0x3c] sm:$0xf]
    %v2077 = vld [vmem:[#allocation8 + $0x40] sm:$0xf]
    %v2078 = vld [vmem:[#allocation8 + $0x44] sm:$0xf]
    %v2079 = vld [vmem:[#allocation8 + $0x48] sm:$0xf]
    %v2080 = vld [vmem:[#allocation8 + $0x4c] sm:$0xf]
    %v2081 = vld [vmem:[#allocation8 + $0x50] sm:$0xf]
    %v2082 = vld [vmem:[#allocation8 + $0x54] sm:$0xf]
    %v2083 = vld [vmem:[#allocation8 + $0x58] sm:$0xf]
    %v2084 = vld [vmem:[#allocation8 + $0x5c] sm:$0xf]
    %v2085 = vld [vmem:[#allocation8 + $0x60] sm:$0xf]
    %v2086 = vld [vmem:[#allocation8 + $0x64] sm:$0xf]
    %v2087 = vld [vmem:[#allocation8 + $0x68] sm:$0xf]
    %v2088 = vld [vmem:[#allocation8 + $0x6c] sm:$0xf]
    %v2089 = vld [vmem:[#allocation8 + $0x70] sm:$0xf]
    %v2090 = vld [vmem:[#allocation8 + $0x74] sm:$0xf]
    %v2091 = vld [vmem:[#allocation8 + $0x78] sm:$0xf]
    %v2092 = vld [vmem:[#allocation8 + $0x7c] sm:$0xf]
    %v2093 = vld [vmem:[#allocation8 + $0x80] sm:$0xf]
    %v2094 = vld [vmem:[#allocation8 + $0x84] sm:$0xf]
    %v2095 = vld [vmem:[#allocation8 + $0x88] sm:$0xf]
    %v2096 = vld [vmem:[#allocation8 + $0x8c] sm:$0xf]
    %v2097 = vld [vmem:[#allocation8 + $0x90] sm:$0xf]
    %v2098 = vld [vmem:[#allocation8 + $0x94] sm:$0xf]
    %v2099 = vld [vmem:[#allocation8 + $0x98] sm:$0xf]
    %v2100 = vld [vmem:[#allocation8 + $0x9c] sm:$0xf]
    %v2101 = vld [vmem:[#allocation8 + $0xa0] sm:$0xf]
    %v2102 = vld [vmem:[#allocation8 + $0xa4] sm:$0xf]
    %v2103 = vld [vmem:[#allocation8 + $0xa8] sm:$0xf]
    %v2104 = vld [vmem:[#allocation8 + $0xac] sm:$0xf]
    %v2105 = vld [vmem:[#allocation8 + $0xb0] sm:$0xf]
    %v2106 = vld [vmem:[#allocation8 + $0xb4] sm:$0xf]
    %v2107 = vld [vmem:[#allocation8 + $0xb8] sm:$0xf]
    %v2108 = vld [vmem:[#allocation8 + $0xbc] sm:$0xf]
    %v2109 = vld [vmem:[#allocation8 + $0xc0] sm:$0xf]
    %v2110 = vld [vmem:[#allocation8 + $0xc4] sm:$0xf]
    %v2111 = vld [vmem:[#allocation8 + $0xc8] sm:$0xf]
    %v2112 = vld [vmem:[#allocation8 + $0xcc] sm:$0xf]
    %v2113 = vld [vmem:[#allocation8 + $0xd0] sm:$0xf]
    %v2114 = vld [vmem:[#allocation8 + $0xd4] sm:$0xf]
    %v2115 = vld [vmem:[#allocation8 + $0xd8] sm:$0xf]
    %v2116 = vld [vmem:[#allocation8 + $0xdc] sm:$0xf]
    %v2117 = vld [vmem:[#allocation8 + $0xe0] sm:$0xf]
    %v2118 = vld [vmem:[#allocation8 + $0xe4] sm:$0xf]
    %v2119 = vld [vmem:[#allocation8 + $0xe8] sm:$0xf]
    %v2120 = vld [vmem:[#allocation8 + $0xec] sm:$0xf]
    %v2121 = vld [vmem:[#allocation8 + $0xf0] sm:$0xf]
    %v2122 = vld [vmem:[#allocation8 + $0xf4] sm:$0xf]
    %v2123 = vld [vmem:[#allocation8 + $0xf8] sm:$0xf]
    %v2124 = vld [vmem:[#allocation8 + $0xfc] sm:$0xf]
    %v2125 = vld [vmem:[#allocation8 + $0x100] sm:$0xf]
    %v2126 = vld [vmem:[#allocation8 + $0x104] sm:$0xf]
    %v2127 = vld [vmem:[#allocation8 + $0x108] sm:$0xf]
    %v2128 = vld [vmem:[#allocation8 + $0x10c] sm:$0xf]
    %v2129 = vld [vmem:[#allocation8 + $0x110] sm:$0xf]
    %v2130 = vld [vmem:[#allocation8 + $0x114] sm:$0xf]
    %v2131 = vld [vmem:[#allocation8 + $0x118] sm:$0xf]
    %v2132 = vld [vmem:[#allocation8 + $0x11c] sm:$0xf]
    %v2133 = vld [vmem:[#allocation8 + $0x120] sm:$0xf]
    %v2134 = vld [vmem:[#allocation8 + $0x124] sm:$0xf]
    %v2135 = vld [vmem:[#allocation8 + $0x128] sm:$0xf]
    %v2136 = vld [vmem:[#allocation8 + $0x12c] sm:$0xf]
    %v2137 = vld [vmem:[#allocation8 + $0x130] sm:$0xf]
    %v2138 = vld [vmem:[#allocation8 + $0x134] sm:$0xf]
    %v2139 = vld [vmem:[#allocation8 + $0x138] sm:$0xf]
    %v2140 = vld [vmem:[#allocation8 + $0x13c] sm:$0xf]
    %v2141 = vld [vmem:[#allocation8 + $0x140] sm:$0xf]
    %v2142 = vld [vmem:[#allocation8 + $0x144] sm:$0xf]
    %v2143 = vld [vmem:[#allocation8 + $0x148] sm:$0xf]
    %v2144 = vld [vmem:[#allocation8 + $0x14c] sm:$0xf]
    %v2145 = vld [vmem:[#allocation8 + $0x150] sm:$0xf]
    %v2146 = vld [vmem:[#allocation8 + $0x154] sm:$0xf]
    %v2147 = vld [vmem:[#allocation8 + $0x158] sm:$0xf]
    %v2148 = vld [vmem:[#allocation8 + $0x15c] sm:$0xf]
    %v2149 = vld [vmem:[#allocation8 + $0x160] sm:$0xf]
    %v2150 = vld [vmem:[#allocation8 + $0x164] sm:$0xf]
    %v2151 = vld [vmem:[#allocation8 + $0x168] sm:$0xf]
    %v2152 = vld [vmem:[#allocation8 + $0x16c] sm:$0xf]
    %v2153 = vld [vmem:[#allocation8 + $0x170] sm:$0xf]
    %v2154 = vld [vmem:[#allocation8 + $0x174] sm:$0xf]
    %v2155 = vld [vmem:[#allocation8 + $0x178] sm:$0xf]
    %v2156 = vld [vmem:[#allocation8 + $0x17c] sm:$0xf]
    %v2157 = vpack.c.bf16 %v2055, %v2055
    %v2158 = vpack.c.bf16 %v2056, %v2056
    %v2159 = vpack.c.bf16 %v2057, %v2057
    %v2160 = vpack.c.bf16 %v2058, %v2058
    %v2161 = vpack.c.bf16 %v2059, %v2059
    %v2162 = vpack.c.bf16 %v2060, %v2060
    %v2163 = vld [vmem:[%s6] sm:$0x1]
    %v2165 = vlaneseq
    %v2166 = vshrl.u32 %v2165, 7
    %v2167 = vsub.s32 0, %v2166
    %v2168 = vrot.slane %v2163, %v2167
    %v2266 = vunpack.c.l.b16 %v2061
    %v2267 = vunpack.c.l.b16 %v2062
    %v2268 = vunpack.c.l.b16 %v2063
    %v2269 = vunpack.c.l.b16 %v2064
    %v2270 = vunpack.c.l.b16 %v2065
    %v2271 = vunpack.c.l.b16 %v2066
    %v2272 = vunpack.c.l.b16 %v2067
    %v2273 = vunpack.c.l.b16 %v2068
    %v2274 = vunpack.c.l.b16 %v2069
    %v2275 = vunpack.c.l.b16 %v2070
    %v2276 = vunpack.c.l.b16 %v2071
    %v2277 = vunpack.c.l.b16 %v2072
    %v2278 = vunpack.c.l.b16 %v2073
    %v2279 = vunpack.c.l.b16 %v2074
    %v2280 = vunpack.c.l.b16 %v2075
    %v2281 = vunpack.c.l.b16 %v2076
    %v2282 = vunpack.c.l.b16 %v2077
    %v2283 = vunpack.c.l.b16 %v2078
    %v2284 = vunpack.c.l.b16 %v2079
    %v2285 = vunpack.c.l.b16 %v2080
    %v2286 = vunpack.c.l.b16 %v2081
    %v2287 = vunpack.c.l.b16 %v2082
    %v2288 = vunpack.c.l.b16 %v2083
    %v2289 = vunpack.c.l.b16 %v2084
    %v2290 = vunpack.c.l.b16 %v2085
    %v2291 = vunpack.c.l.b16 %v2086
    %v2292 = vunpack.c.l.b16 %v2087
    %v2293 = vunpack.c.l.b16 %v2088
    %v2294 = vunpack.c.l.b16 %v2089
    %v2295 = vunpack.c.l.b16 %v2090
    %v2296 = vunpack.c.l.b16 %v2091
    %v2297 = vunpack.c.l.b16 %v2092
    %v2298 = vunpack.c.l.b16 %v2093
    %v2299 = vunpack.c.l.b16 %v2094
    %v2300 = vunpack.c.l.b16 %v2095
    %v2301 = vunpack.c.l.b16 %v2096
    %v2302 = vunpack.c.l.b16 %v2097
    %v2303 = vunpack.c.l.b16 %v2098
    %v2304 = vunpack.c.l.b16 %v2099
    %v2305 = vunpack.c.l.b16 %v2100
    %v2306 = vunpack.c.l.b16 %v2101
    %v2307 = vunpack.c.l.b16 %v2102
    %v2308 = vunpack.c.l.b16 %v2103
    %v2309 = vunpack.c.l.b16 %v2104
    %v2310 = vunpack.c.l.b16 %v2105
    %v2311 = vunpack.c.l.b16 %v2106
    %v2312 = vunpack.c.l.b16 %v2107
    %v2313 = vunpack.c.l.b16 %v2108
    %v2314 = vunpack.c.l.b16 %v2109
    %v2315 = vunpack.c.l.b16 %v2110
    %v2316 = vunpack.c.l.b16 %v2111
    %v2317 = vunpack.c.l.b16 %v2112
    %v2318 = vunpack.c.l.b16 %v2113
    %v2319 = vunpack.c.l.b16 %v2114
    %v2320 = vunpack.c.l.b16 %v2115
    %v2321 = vunpack.c.l.b16 %v2116
    %v2322 = vunpack.c.l.b16 %v2117
    %v2323 = vunpack.c.l.b16 %v2118
    %v2324 = vunpack.c.l.b16 %v2119
    %v2325 = vunpack.c.l.b16 %v2120
    %v2326 = vunpack.c.l.b16 %v2121
    %v2327 = vunpack.c.l.b16 %v2122
    %v2328 = vunpack.c.l.b16 %v2123
    %v2329 = vunpack.c.l.b16 %v2124
    %v2330 = vunpack.c.l.b16 %v2125
    %v2331 = vunpack.c.l.b16 %v2126
    %v2332 = vunpack.c.l.b16 %v2127
    %v2333 = vunpack.c.l.b16 %v2128
    %v2334 = vunpack.c.l.b16 %v2129
    %v2335 = vunpack.c.l.b16 %v2130
    %v2336 = vunpack.c.l.b16 %v2131
    %v2337 = vunpack.c.l.b16 %v2132
    %v2338 = vunpack.c.l.b16 %v2133
    %v2339 = vunpack.c.l.b16 %v2134
    %v2340 = vunpack.c.l.b16 %v2135
    %v2341 = vunpack.c.l.b16 %v2136
    %v2342 = vunpack.c.l.b16 %v2137
    %v2343 = vunpack.c.l.b16 %v2138
    %v2344 = vunpack.c.l.b16 %v2139
    %v2345 = vunpack.c.l.b16 %v2140
    %v2346 = vunpack.c.l.b16 %v2141
    %v2347 = vunpack.c.l.b16 %v2142
    %v2348 = vunpack.c.l.b16 %v2143
    %v2349 = vunpack.c.l.b16 %v2144
    %v2350 = vunpack.c.l.b16 %v2145
    %v2351 = vunpack.c.l.b16 %v2146
    %v2352 = vunpack.c.l.b16 %v2147
    %v2353 = vunpack.c.l.b16 %v2148
    %v2354 = vunpack.c.l.b16 %v2149
    %v2355 = vunpack.c.l.b16 %v2150
    %v2356 = vunpack.c.l.b16 %v2151
    %v2357 = vunpack.c.l.b16 %v2152
    %v2358 = vunpack.c.l.b16 %v2153
    %v2359 = vunpack.c.l.b16 %v2154
    %v2360 = vunpack.c.l.b16 %v2155
    %v2361 = vunpack.c.l.b16 %v2156
    %v2362 = vpack.c.b16 %v2267, %v2266
    %v2363 = vpack.c.b16 %v2269, %v2268
    %v2364 = vpack.c.b16 %v2271, %v2270
    %v2365 = vpack.c.b16 %v2273, %v2272
    %v2366 = vpack.c.b16 %v2275, %v2274
    %v2367 = vpack.c.b16 %v2277, %v2276
    %v2368 = vpack.c.b16 %v2279, %v2278
    %v2369 = vpack.c.b16 %v2281, %v2280
    %v2370 = vpack.c.b16 %v2283, %v2282
    %v2371 = vpack.c.b16 %v2285, %v2284
    %v2372 = vpack.c.b16 %v2287, %v2286
    %v2373 = vpack.c.b16 %v2289, %v2288
    %v2374 = vpack.c.b16 %v2291, %v2290
    %v2375 = vpack.c.b16 %v2293, %v2292
    %v2376 = vpack.c.b16 %v2295, %v2294
    %v2377 = vpack.c.b16 %v2297, %v2296
    %v2378 = vpack.c.b16 %v2299, %v2298
    %v2379 = vpack.c.b16 %v2301, %v2300
    %v2380 = vpack.c.b16 %v2303, %v2302
    %v2381 = vpack.c.b16 %v2305, %v2304
    %v2382 = vpack.c.b16 %v2307, %v2306
    %v2383 = vpack.c.b16 %v2309, %v2308
    %v2384 = vpack.c.b16 %v2311, %v2310
    %v2385 = vpack.c.b16 %v2313, %v2312
    %v2386 = vpack.c.b16 %v2315, %v2314
    %v2387 = vpack.c.b16 %v2317, %v2316
    %v2388 = vpack.c.b16 %v2319, %v2318
    %v2389 = vpack.c.b16 %v2321, %v2320
    %v2390 = vpack.c.b16 %v2323, %v2322
    %v2391 = vpack.c.b16 %v2325, %v2324
    %v2392 = vpack.c.b16 %v2327, %v2326
    %v2393 = vpack.c.b16 %v2329, %v2328
    %v2394 = vpack.c.b16 %v2331, %v2330
    %v2395 = vpack.c.b16 %v2333, %v2332
    %v2396 = vpack.c.b16 %v2335, %v2334
    %v2397 = vpack.c.b16 %v2337, %v2336
    %v2398 = vpack.c.b16 %v2339, %v2338
    %v2399 = vpack.c.b16 %v2341, %v2340
    %v2400 = vpack.c.b16 %v2343, %v2342
    %v2401 = vpack.c.b16 %v2345, %v2344
    %v2402 = vpack.c.b16 %v2347, %v2346
    %v2403 = vpack.c.b16 %v2349, %v2348
    %v2404 = vpack.c.b16 %v2351, %v2350
    %v2405 = vpack.c.b16 %v2353, %v2352
    %v2406 = vpack.c.b16 %v2355, %v2354
    %v2407 = vpack.c.b16 %v2357, %v2356
    %v2408 = vpack.c.b16 %v2359, %v2358
    %v2409 = vpack.c.b16 %v2361, %v2360
    %2458 = vmatprep.subr.bf16.mxu0 0
    %2459 = vmatpush1.bf16.msra.mxu0 %v2362
    %2460 = vmatprep.subr.bf16.mxu0 0
    %2461 = vmatpush1.bf16.msra.mxu0 %v2363
    %2462 = vmatprep.subr.bf16.mxu0 0
    %2463 = vmatpush1.bf16.msra.mxu0 %v2364
    %2464 = vmatprep.subr.bf16.mxu0 0
    %2465 = vmatpush1.bf16.msra.mxu0 %v2365
    %2466 = vmatprep.subr.bf16.mxu0 0
    %2467 = vmatpush1.bf16.msra.mxu0 %v2366
    %2468 = vmatprep.subr.bf16.mxu0 0
    %2469 = vmatpush1.bf16.msra.mxu0 %v2367
    %2470 = vmatprep.subr.bf16.mxu0 0
    %2471 = vmatpush1.bf16.msra.mxu0 %v2368
    %2472 = vmatprep.subr.bf16.mxu0 0
    %2473 = vmatpush1.bf16.msra.mxu0 %v2369
    %2474 = vmatprep.subr.bf16.mxu0 0
    %2475 = vmatpush1.bf16.msra.mxu0 %v2370
    %2476 = vmatprep.subr.bf16.mxu0 0
    %2477 = vmatpush1.bf16.msra.mxu0 %v2371
    %2478 = vmatprep.subr.bf16.mxu0 0
    %2479 = vmatpush1.bf16.msra.mxu0 %v2372
    %2480 = vmatprep.subr.bf16.mxu0 0
    %2481 = vmatpush1.bf16.msra.mxu0 %v2373
    %2482 = vmatprep.subr.bf16.mxu0 0
    %2483 = vmatpush1.bf16.msra.mxu0 %v2374
    %2484 = vmatprep.subr.bf16.mxu0 0
    %2485 = vmatpush1.bf16.msra.mxu0 %v2375
    %2486 = vmatprep.subr.bf16.mxu0 0
    %2487 = vmatpush1.bf16.msra.mxu0 %v2376
    %2488 = vmatprep.subr.bf16.mxu0 0
    %2489 = vmatpush1.bf16.msra.mxu0 %v2377
    %2490 = vmatprep.mubr.bf16.mxu0 %v2158
    %2491 = vmatmul.mubr.bf16.gmra.mrb[0].mxu0 %v2157
    %v2492 = vpop.f32.mrb[0].mxu0
    %v2493 = vadd.f32 %v2168, %v2492
    %v2494 = vpop.f32.mrb[0].mxu0
    %v2495 = vpop.f32.mrb[0].mxu0
    %v2496 = vpop.f32.mrb[0].mxu0
    %2497 = vdwg.mxu0
    %2498 = vmatprep.subr.bf16.mxu0 0
    %2499 = vmatpush1.bf16.msra.mxu0 %v2378
    %2500 = vmatprep.subr.bf16.mxu0 0
    %2501 = vmatpush1.bf16.msra.mxu0 %v2379
    %2502 = vmatprep.subr.bf16.mxu0 0
    %2503 = vmatpush1.bf16.msra.mxu0 %v2380
    %2504 = vmatprep.subr.bf16.mxu0 0
    %2505 = vmatpush1.bf16.msra.mxu0 %v2381
    %2506 = vmatprep.subr.bf16.mxu0 0
    %2507 = vmatpush1.bf16.msra.mxu0 %v2382
    %2508 = vmatprep.subr.bf16.mxu0 0
    %2509 = vmatpush1.bf16.msra.mxu0 %v2383
    %2510 = vmatprep.subr.bf16.mxu0 0
    %2511 = vmatpush1.bf16.msra.mxu0 %v2384
    %2512 = vmatprep.subr.bf16.mxu0 0
    %2513 = vmatpush1.bf16.msra.mxu0 %v2385
    %2514 = vmatprep.subr.bf16.mxu0 0
    %2515 = vmatpush1.bf16.msra.mxu0 %v2386
    %2516 = vmatprep.subr.bf16.mxu0 0
    %2517 = vmatpush1.bf16.msra.mxu0 %v2387
    %2518 = vmatprep.subr.bf16.mxu0 0
    %2519 = vmatpush1.bf16.msra.mxu0 %v2388
    %2520 = vmatprep.subr.bf16.mxu0 0
    %2521 = vmatpush1.bf16.msra.mxu0 %v2389
    %2522 = vmatprep.subr.bf16.mxu0 0
    %2523 = vmatpush1.bf16.msra.mxu0 %v2390
    %2524 = vmatprep.subr.bf16.mxu0 0
    %2525 = vmatpush1.bf16.msra.mxu0 %v2391
    %2526 = vmatprep.subr.bf16.mxu0 0
    %2527 = vmatpush1.bf16.msra.mxu0 %v2392
    %2528 = vmatprep.subr.bf16.mxu0 0
    %2529 = vmatpush1.bf16.msra.mxu0 %v2393
    %2530 = vmatprep.mubr.bf16.mxu0 %v2160
    %2531 = vmatmul.mubr.bf16.gmra.mrb[0].mxu0 %v2159
    %v2532 = vpop.f32.mrb[0].mxu0
    %v2533 = vadd.f32 %v2493, %v2532
    %v2534 = vpop.f32.mrb[0].mxu0
    %v2535 = vpop.f32.mrb[0].mxu0
    %v2536 = vpop.f32.mrb[0].mxu0
    %2537 = vdwg.mxu0
    %2538 = vmatprep.subr.bf16.mxu0 0
    %2539 = vmatpush1.bf16.msra.mxu0 %v2394
    %2540 = vmatprep.subr.bf16.mxu0 0
    %2541 = vmatpush1.bf16.msra.mxu0 %v2395
    %2542 = vmatprep.subr.bf16.mxu0 0
    %2543 = vmatpush1.bf16.msra.mxu0 %v2396
    %2544 = vmatprep.subr.bf16.mxu0 0
    %2545 = vmatpush1.bf16.msra.mxu0 %v2397
    %2546 = vmatprep.subr.bf16.mxu0 0
    %2547 = vmatpush1.bf16.msra.mxu0 %v2398
    %2548 = vmatprep.subr.bf16.mxu0 0
    %2549 = vmatpush1.bf16.msra.mxu0 %v2399
    %2550 = vmatprep.subr.bf16.mxu0 0
    %2551 = vmatpush1.bf16.msra.mxu0 %v2400
    %2552 = vmatprep.subr.bf16.mxu0 0
    %2553 = vmatpush1.bf16.msra.mxu0 %v2401
    %2554 = vmatprep.subr.bf16.mxu0 0
    %2555 = vmatpush1.bf16.msra.mxu0 %v2402
    %2556 = vmatprep.subr.bf16.mxu0 0
    %2557 = vmatpush1.bf16.msra.mxu0 %v2403
    %2558 = vmatprep.subr.bf16.mxu0 0
    %2559 = vmatpush1.bf16.msra.mxu0 %v2404
    %2560 = vmatprep.subr.bf16.mxu0 0
    %2561 = vmatpush1.bf16.msra.mxu0 %v2405
    %2562 = vmatprep.subr.bf16.mxu0 0
    %2563 = vmatpush1.bf16.msra.mxu0 %v2406
    %2564 = vmatprep.subr.bf16.mxu0 0
    %2565 = vmatpush1.bf16.msra.mxu0 %v2407
    %2566 = vmatprep.subr.bf16.mxu0 0
    %2567 = vmatpush1.bf16.msra.mxu0 %v2408
    %2568 = vmatprep.subr.bf16.mxu0 0
    %2569 = vmatpush1.bf16.msra.mxu0 %v2409
    %2570 = vmatprep.mubr.bf16.mxu0 %v2162
    %2571 = vmatmul.mubr.bf16.gmra.mrb[0].mxu0 %v2161
    %v2572 = vpop.f32.mrb[0].mxu0
    %v2573 = vadd.f32 %v2533, %v2572
    %v2574 = vpop.f32.mrb[0].mxu0
    %v2575 = vpop.f32.mrb[0].mxu0
    %v2576 = vpop.f32.mrb[0].mxu0
    %2577 = vdwg.mxu0
    %2578 = vst [vmem:[#allocation10] sm:$0xff] %v2573
    // Predicated region
    $region46: #{tpu_custom_call.1} parent=1 // pred_check
      _
    $region47: #{tpu_custom_call.1} parent=1 // pred_check_branch
      %2580 = sbr.rel (0) target = $region49
    $region48: #{tpu_custom_call.1} parent=1 // pred_region
      %s2582 = ssub.s32 128, 32
      %2583 = vsyncadd [#allocation4], %s2582
      %s2584 = sshll.u32 [#allocation10], 4
      %s2585 = int_to_ptr.vmem [resolvable:$true] %s2584
      %2590 = dma.vmem_to_hbm [thread:$0]  %s2585, 32, %s7, [#allocation4], 32, 32, 2
    $region49: #{tpu_custom_call.1} parent=1 // pred_fallthru
      _
    // Predicated region
    $region50: #{tpu_custom_call.1} parent=1 // pred_check
      _
    $region51: #{tpu_custom_call.1} parent=1 // pred_check_branch
      %2592 = sbr.rel (0) target = $region53
    $region52: #{tpu_custom_call.1} parent=1 // pred_region
      %2593 = dma.done [#allocation4], 128
    $region53: #{tpu_custom_call.1} parent=1 // pred_fallthru
      _
    %2594 = vsyncpa [#allocation3], 1
    %2595 = vsyncpa [#allocation6], 1
    %2596 = vsyncpa [#allocation9], 1
    %2597 = vsyncpa [#allocation4], 1

</llo_original>
